<compile_context>
chip_gen: v7x
topology: tpu7x:2x2x1
jax: 0.10.0
libtpu: 0.0.40
codegen_flags: <defaults>
</compile_context>

<pallas_src>
import functools
import math

import jax
import jax.numpy as jnp
from jax.experimental import pallas as pl
from jax.experimental.pallas import tpu as pltpu

LANE = 128
_MIB = 1 << 20


def _round_up(x, m):
    return ((x + m - 1) // m) * m


def _vmem_capacity_bytes():
    try:
        return int(pltpu.get_tpu_info().vmem_capacity_bytes)
    except Exception:
        return 64 * _MIB          # conservative (v7x per-core VMEM)


def _vmem_budget_bytes():
    # ~55% of physical VMEM for our blocks; the rest for compiler scratch / spills.
    return (_vmem_capacity_bytes() * 55) // 100


def _vmem_limit_for(need_bytes):
    cap = _vmem_capacity_bytes()
    limit = min(cap - 4 * _MIB, int(need_bytes) + 8 * _MIB)
    return int(max(limit, 32 * _MIB))


def _pick_row_tile(num_rows, per_row_bytes, fixed_bytes, budget_bytes, row_cap=2048):
    """Largest 8-aligned row tile fitting the VMEM budget, capped so the grid has
    >= 2 steps when possible (so both v7x TensorCores get work)."""
    if num_rows <= 8:
        return num_rows
    avail = max(budget_bytes - fixed_bytes, 8 * per_row_bytes)
    tm = min(avail // max(per_row_bytes, 1), row_cap)
    if num_rows >= 16:
        tm = min(tm, _round_up(pl.cdiv(num_rows, 2), 8))
    if tm >= num_rows:
        return num_rows
    return max(8, (int(tm) // 8) * 8)


# --------------------------------------------------------------------------
# Kernels
# --------------------------------------------------------------------------

def _concat_linear_kernel(num_layers, compute_dtype, *refs):
    """refs = (x_0..x_{L-1}, w, b, o).

    x_l : (tm, D)      row-tile of layer l
    w   : (L, D, tn)   per-layer weight slab (grid-invariant in resident path)
    b   : (1, tn)
    o   : (tm, tn)
    o = sum_l x_l @ w[l] + b   (MXU matmuls, f32 accumulation).
    """
    x_refs = refs[:num_layers]
    w_ref = refs[num_layers]
    b_ref = refs[num_layers + 1]
    o_ref = refs[num_layers + 2]

    def cvt(v):
        return v if compute_dtype is None else v.astype(compute_dtype)

    acc = jnp.dot(cvt(x_refs[0][...]), cvt(w_ref[0]),
                  preferred_element_type=jnp.float32)
    for l in range(1, num_layers):
        acc = acc + jnp.dot(cvt(x_refs[l][...]), cvt(w_ref[l]),
                            preferred_element_type=jnp.float32)
    o_ref[...] = (acc + b_ref[...].astype(jnp.float32)).astype(o_ref.dtype)


def _reduce_kernel(num_layers, op, *refs):
    """refs = (x_0..x_{L-1}, o); elementwise sum/max over layers, tiled on rows."""
    x_refs = refs[:num_layers]
    o_ref = refs[num_layers]
    if op == "sum":
        acc = x_refs[0][...].astype(jnp.float32)          # f32 accumulation
        for l in range(1, num_layers):
            acc = acc + x_refs[l][...].astype(jnp.float32)
        o_ref[...] = acc.astype(o_ref.dtype)
    else:                                                 # 'max'
        acc = x_refs[0][...]
        for l in range(1, num_layers):
            acc = jnp.maximum(acc, x_refs[l][...])
        o_ref[...] = acc


# --------------------------------------------------------------------------
# pallas_call wrappers
# --------------------------------------------------------------------------

def _pallas_concat_linear(xs2d, w3, b2, out_dtype, compute_dtype):
    """concat(xs2d, -1) @ W + b without materializing the concatenation.

    xs2d: list of L arrays [M, D]; w3: [L, D, O]; b2: [1, O]. Returns [M, O].
    """
    L = len(xs2d)
    M, D = xs2d[0].shape
    O = w3.shape[-1]
    x_sz = jnp.dtype(xs2d[0].dtype).itemsize
    w_sz = jnp.dtype(w3.dtype).itemsize
    o_sz = jnp.dtype(out_dtype).itemsize
    budget = _vmem_budget_bytes()
    w_bytes = L * D * O * w_sz

    kernel = functools.partial(_concat_linear_kernel, L, compute_dtype)

    if 2 * w_bytes <= budget // 2:
        # -------- resident-weight path: W/b DMA'd once, 1-D row grid --------
        per_row = 2 * L * D * x_sz + 2 * O * o_sz          # 2x-buffered x tiles + out
        tm = _pick_row_tile(M, per_row, 2 * w_bytes, budget)
        gm = pl.cdiv(M, tm)
        need = 2 * w_bytes + tm * per_row
        params = pltpu.CompilerParams(
            dimension_semantics=("parallel",),
            vmem_limit_bytes=_vmem_limit_for(need))

        def run(use_single_buffer):
            kw = {"pipeline_mode": pl.Buffered(1)} if use_single_buffer else {}
            in_specs = [pl.BlockSpec((tm, D), lambda i: (i, 0)) for _ in range(L)]
            in_specs.append(pl.BlockSpec((L, D, O), lambda i: (0, 0, 0), **kw))
            in_specs.append(pl.BlockSpec((1, O), lambda i: (0, 0), **kw))
            return pl.pallas_call(
                kernel,
                out_shape=jax.ShapeDtypeStruct((M, O), out_dtype),
                grid=(gm,),
                in_specs=in_specs,
                out_specs=pl.BlockSpec((tm, O), lambda i: (i, 0)),
                compiler_params=params,
            )(*xs2d, w3, b2)

        if hasattr(pl, "Buffered"):
            try:
                return run(True)            # grid-invariant block: 1 buffer suffices
            except Exception:
                pass
        return run(False)

    # -------- fallback (rare): weight too big to be VMEM-resident; tile columns --
    tn = LANE if O > LANE else O
    gn = pl.cdiv(O, tn)
    fixed = 2 * (L * D * tn * w_sz + tn * o_sz)
    per_row = 2 * L * D * x_sz + 2 * tn * o_sz
    tm = _pick_row_tile(M, per_row, fixed, budget)
    gm = pl.cdiv(M, tm)
    need = fixed + tm * per_row
    return pl.pallas_call(
        kernel,
        out_shape=jax.ShapeDtypeStruct((M, O), out_dtype),
        grid=(gm, gn),
        in_specs=[pl.BlockSpec((tm, D), lambda i, j: (i, 0)) for _ in range(L)]
        + [pl.BlockSpec((L, D, tn), lambda i, j: (0, 0, j)),
           pl.BlockSpec((1, tn), lambda i, j: (0, j))],
        out_specs=pl.BlockSpec((tm, tn), lambda i, j: (i, j)),
        compiler_params=pltpu.CompilerParams(
            dimension_semantics=("parallel", "parallel"),
            vmem_limit_bytes=_vmem_limit_for(need)),
    )(*xs2d, w3, b2)


def _lane_dense_view(shape):
    """Pick a lane-dense 2-D view (rows, W) with W % 128 == 0 when possible."""
    n = math.prod(shape)
    d = shape[-1]
    if d % LANE == 0:
        return n // d, d
    if n % LANE == 0:
        w = LANE
        while w * 2 <= 2048 and n % (w * 2) == 0:
            w *= 2
        return n // w, w
    return n // d, d              # fallback: not lane-dense, still correct


def _pallas_layer_reduce(xs, op):
    """Elementwise sum/max over the layer list; each xs[i] is [B, T, D]."""
    L = len(xs)
    orig_shape = xs[0].shape
    dtype = xs[0].dtype
    R, W = _lane_dense_view(orig_shape)
    xs2d = [x.reshape(R, W) for x in xs]       # contiguous reshapes (no copy)

    itemsize = jnp.dtype(dtype).itemsize
    per_row = (2 * L + 2) * W * itemsize       # 2x-buffered L inputs + output
    tm = _pick_row_tile(R, per_row, 0, _vmem_budget_bytes(), row_cap=4096)
    gm = pl.cdiv(R, tm)
    need = tm * per_row

    out = pl.pallas_call(
        functools.partial(_reduce_kernel, L, op),
        out_shape=jax.ShapeDtypeStruct((R, W), dtype),
        grid=(gm,),
        in_specs=[pl.BlockSpec((tm, W), lambda i: (i, 0)) for _ in range(L)],
        out_specs=pl.BlockSpec((tm, W), lambda i: (i, 0)),
        compiler_params=pltpu.CompilerParams(
            dimension_semantics=("parallel",),
            vmem_limit_bytes=_vmem_limit_for(need)),
    )(*xs2d)
    return out.reshape(orig_shape)


# --------------------------------------------------------------------------
# JumpKnowledge forward
# --------------------------------------------------------------------------

class JumpKnowledgePallas:
    """Pallas re-implementation of JumpKnowledge (modes: last/sum/max/concat)."""

    def __init__(self, mode="concat", hidden_size=None, output_size=None,
                 num_layers=None, dtype=jnp.float32, mxu_bf16=False, key=None):
        self.mode = mode
        self.hidden_size = hidden_size
        self.output_size = output_size
        self.num_layers = num_layers
        self.dtype = dtype
        self.mxu_bf16 = bool(mxu_bf16)         # bf16 MXU path (f32 accumulation)
        self._key = key if key is not None else jax.random.PRNGKey(0)

        self.w = None           # [L*D, O]  (transpose of torch's [O, L*D]) -- f32 master
        self.b = None           # [O]
        self._w_kernel = None   # weight fed to the kernel (optionally bf16)
        self._b_kernel = None   # [1, O]

        if (mode == "concat" and num_layers is not None
                and hidden_size is not None and output_size is not None):
            self._init_concat_projection(num_layers * hidden_size)
        # TODO(synk): 'lstm' mode (nn.LSTM over the layer axis) is not implemented.

    def _init_concat_projection(self, concat_dim):
        if self.output_size is None:
            raise ValueError("output_size must be provided for concat mode")
        O = self.output_size
        limit = math.sqrt(6.0 / (concat_dim + O))          # xavier-uniform-like init
        self.w = jax.random.uniform(self._key, (concat_dim, O), dtype=self.dtype,
                                    minval=-limit, maxval=limit)
        self.b = jnp.zeros((O,), dtype=self.dtype)
        self._w_kernel = self.w.astype(jnp.bfloat16) if self.mxu_bf16 else self.w
        self._b_kernel = self.b.reshape(1, O)

    def __call__(self, xs):
        if not xs:
            raise ValueError("Input list cannot be empty")
        base_shape = xs[0].shape[:-1]
        for x in xs[1:]:
            assert x.shape[:-1] == base_shape, "Shape mismatch across layers"

        if self.mode == "last":
            return xs[-1]
        if self.mode in ("sum", "max"):
            return _pallas_layer_reduce(xs, self.mode)
        if self.mode == "concat":
            B, T, D = xs[0].shape
            L = len(xs)
            M = B * T
            if self.w is None:                  # lazy init (matches torch module)
                self._init_concat_projection(L * D)
            assert self.w.shape[0] == L * D, "num_layers*hidden_size mismatch"
            O = self.output_size
            xs2d = [x.reshape(M, D) for x in xs]          # contiguous reshapes
            w3 = self._w_kernel.reshape(L, D, O)          # contiguous reshape (no copy)
            compute_dtype = jnp.bfloat16 if self.mxu_bf16 else None
            out = _pallas_concat_linear(xs2d, w3, self._b_kernel,
                                        xs[0].dtype, compute_dtype)
            return out.reshape(B, T, O)
        raise NotImplementedError(f"mode={self.mode!r} not implemented in Pallas")


# --------------------------------------------------------------------------
# Demo / self-check
# --------------------------------------------------------------------------

if __name__ == "__main__":
    key = jax.random.PRNGKey(0)

    # -------- small shapes (tiny tiles, O < 128) --------
    B, T, D, L, O = 2, 8, 32, 3, 32
    k_w, *k_xs = jax.random.split(key, L + 1)
    xs = [jax.random.normal(k, (B, T, D), dtype=jnp.float32) for k in k_xs]

    jk = JumpKnowledgePallas(mode="concat", hidden_size=D, output_size=O,
                             num_layers=L, key=k_w)
    out = jax.block_until_ready(jk(xs))
    assert out.shape == (B, T, O)
    x_cat = jnp.concatenate(xs, axis=-1).reshape(B * T, L * D)
    ref = (x_cat @ jk.w + jk.b).reshape(B, T, O)
    assert jnp.allclose(out, ref, atol=1e-5, rtol=1e-5)

    out_sum = jax.block_until_ready(JumpKnowledgePallas(mode="sum")(xs))
    assert jnp.allclose(out_sum, xs[0] + xs[1] + xs[2], atol=1e-5)

    out_max = jax.block_until_ready(JumpKnowledgePallas(mode="max")(xs))
    assert jnp.allclose(out_max, jnp.maximum(jnp.maximum(xs[0], xs[1]), xs[2]))

    out_last = jax.block_until_ready(JumpKnowledgePallas(mode="last")(xs))
    assert jnp.allclose(out_last, xs[-1])

    # -------- larger shapes (tiled row grid, non-multiple-of-128 output cols) ----
    B2, T2, D2, L2, O2 = 4, 128, 64, 4, 160     # M=512 -> >=2 row tiles
    k_w2, *k_xs2 = jax.random.split(jax.random.PRNGKey(1), L2 + 1)
    xs2 = [jax.random.normal(k, (B2, T2, D2), dtype=jnp.float32) for k in k_xs2]
    jk2 = JumpKnowledgePallas(mode="concat", hidden_size=D2, output_size=O2,
                              num_layers=L2, key=k_w2)
    out2 = jax.block_until_ready(jk2(xs2))
    assert out2.shape == (B2, T2, O2)
    x_cat2 = jnp.concatenate(xs2, axis=-1).reshape(B2 * T2, L2 * D2)
    ref2 = (x_cat2 @ jk2.w + jk2.b).reshape(B2, T2, O2)
    assert jnp.allclose(out2, ref2, atol=1e-3, rtol=1e-3)

    # bf16 MXU path (f32 accumulation): looser tolerance by design
    jk2_bf16 = JumpKnowledgePallas(mode="concat", hidden_size=D2, output_size=O2,
                                   num_layers=L2, mxu_bf16=True, key=k_w2)
    out2b = jax.block_until_ready(jk2_bf16(xs2))
    assert out2b.shape == (B2, T2, O2)
    assert jnp.allclose(out2b, ref2, atol=2.5e-1, rtol=1e-1)

    out_sum2 = jax.block_until_ready(JumpKnowledgePallas(mode="sum")(xs2))
    ref_sum2 = xs2[0] + xs2[1] + xs2[2] + xs2[3]
    assert jnp.allclose(out_sum2, ref_sum2, atol=1e-5)

    out_max2 = jax.block_until_ready(JumpKnowledgePallas(mode="max")(xs2))
    ref_max2 = jnp.maximum(jnp.maximum(jnp.maximum(xs2[0], xs2[1]), xs2[2]), xs2[3])
    assert jnp.allclose(out_max2, ref_max2)

    print("KERNEL_OK")
</pallas_src>

<mosaic_0001>
module attributes {stable_mosaic.version = 11 : i64} {
  func.func @_concat_linear_kernel(%arg0: i32, %arg1: memref<8x32xf32, #tpu.memory_space<vmem>>, %arg2: memref<8x32xf32, #tpu.memory_space<vmem>>, %arg3: memref<8x32xf32, #tpu.memory_space<vmem>>, %arg4: memref<3x32x32xf32, #tpu.memory_space<vmem>>, %arg5: memref<1x32xf32, #tpu.memory_space<vmem>>, %arg6: memref<8x32xf32, #tpu.memory_space<vmem>>) attributes {dimension_semantics = [#tpu.dimension_semantics<parallel>], iteration_bounds = array<i64: 2>, scalar_prefetch = 0 : i64, scratch_operands = 0 : i64, tpu.core_type = #tpu.core_type<tc>, window_params = [{transform_indices = @transform_0, window_bounds = array<i64: 8, 32>}, {transform_indices = @transform_1, window_bounds = array<i64: 8, 32>}, {transform_indices = @transform_2, window_bounds = array<i64: 8, 32>}, {pipeline_mode = #tpu.pipeline_mode<synchronous>, transform_indices = @transform_3, window_bounds = array<i64: 3, 32, 32>}, {pipeline_mode = #tpu.pipeline_mode<synchronous>, transform_indices = @transform_4, window_bounds = array<i64: 1, 32>}, {transform_indices = @transform_5, window_bounds = array<i64: 8, 32>}]} {
    %c0 = arith.constant 0 : index
    %c0_0 = arith.constant 0 : index
    %0 = vector.load %arg1[%c0, %c0_0] : memref<8x32xf32, #tpu.memory_space<vmem>>, vector<8x32xf32>
    %c0_1 = arith.constant 0 : index
    %c0_2 = arith.constant 0 : index
    %c0_3 = arith.constant 0 : index
    %1 = vector.load %arg4[%c0_1, %c0_2, %c0_3] : memref<3x32x32xf32, #tpu.memory_space<vmem>>, vector<1x32x32xf32>
    %2 = vector.shape_cast %1 : vector<1x32x32xf32> to vector<32x32xf32>
    %cst = arith.constant dense<0.000000e+00> : vector<8x32xf32>
    %3 = tpu.matmul %0, %2, %cst {dimension_numbers = #tpu.dot_dimension_numbers<[1], [0], [0], [1], [0, 0, 1, 1], [], []>} : vector<8x32xf32>, vector<32x32xf32>, vector<8x32xf32> -> vector<8x32xf32>
    %c0_4 = arith.constant 0 : index
    %c0_5 = arith.constant 0 : index
    %4 = vector.load %arg2[%c0_4, %c0_5] : memref<8x32xf32, #tpu.memory_space<vmem>>, vector<8x32xf32>
    %c1 = arith.constant 1 : index
    %c0_6 = arith.constant 0 : index
    %c0_7 = arith.constant 0 : index
    %5 = vector.load %arg4[%c1, %c0_6, %c0_7] : memref<3x32x32xf32, #tpu.memory_space<vmem>>, vector<1x32x32xf32>
    %6 = vector.shape_cast %5 : vector<1x32x32xf32> to vector<32x32xf32>
    %cst_8 = arith.constant dense<0.000000e+00> : vector<8x32xf32>
    %7 = tpu.matmul %4, %6, %cst_8 {dimension_numbers = #tpu.dot_dimension_numbers<[1], [0], [0], [1], [0, 0, 1, 1], [], []>} : vector<8x32xf32>, vector<32x32xf32>, vector<8x32xf32> -> vector<8x32xf32>
    %8 = arith.addf %3, %7 : vector<8x32xf32>
    %c0_9 = arith.constant 0 : index
    %c0_10 = arith.constant 0 : index
    %9 = vector.load %arg3[%c0_9, %c0_10] : memref<8x32xf32, #tpu.memory_space<vmem>>, vector<8x32xf32>
    %c2 = arith.constant 2 : index
    %c0_11 = arith.constant 0 : index
    %c0_12 = arith.constant 0 : index
    %10 = vector.load %arg4[%c2, %c0_11, %c0_12] : memref<3x32x32xf32, #tpu.memory_space<vmem>>, vector<1x32x32xf32>
    %11 = vector.shape_cast %10 : vector<1x32x32xf32> to vector<32x32xf32>
    %cst_13 = arith.constant dense<0.000000e+00> : vector<8x32xf32>
    %12 = tpu.matmul %9, %11, %cst_13 {dimension_numbers = #tpu.dot_dimension_numbers<[1], [0], [0], [1], [0, 0, 1, 1], [], []>} : vector<8x32xf32>, vector<32x32xf32>, vector<8x32xf32> -> vector<8x32xf32>
    %13 = arith.addf %8, %12 : vector<8x32xf32>
    %c0_14 = arith.constant 0 : index
    %c0_15 = arith.constant 0 : index
    %14 = vector.load %arg5[%c0_14, %c0_15] : memref<1x32xf32, #tpu.memory_space<vmem>>, vector<1x32xf32>
    %15 = vector.broadcast %14 : vector<1x32xf32> to vector<8x32xf32>
    %16 = arith.addf %13, %15 : vector<8x32xf32>
    %c0_16 = arith.constant 0 : index
    %c0_17 = arith.constant 0 : index
    %17 = vector.load %arg6[%c0_16, %c0_17] : memref<8x32xf32, #tpu.memory_space<vmem>>, vector<8x32xf32>
    tpu.vector_store %arg6[%c0_16, %c0_17], %16 {strides = array<i32>} : memref<8x32xf32, #tpu.memory_space<vmem>>, vector<8x32xf32>,
    return
  }
  func.func @transform_0(%arg0: i32) -> (i32, i32) {
    %c0_i32 = arith.constant 0 : i32
    %c0_i32_0 = arith.constant 0 : i32
    return %arg0, %c0_i32 : i32, i32
  }
  func.func @transform_1(%arg0: i32) -> (i32, i32) {
    %c0_i32 = arith.constant 0 : i32
    %c0_i32_0 = arith.constant 0 : i32
    return %arg0, %c0_i32 : i32, i32
  }
  func.func @transform_2(%arg0: i32) -> (i32, i32) {
    %c0_i32 = arith.constant 0 : i32
    %c0_i32_0 = arith.constant 0 : i32
    return %arg0, %c0_i32 : i32, i32
  }
  func.func @transform_3(%arg0: i32) -> (i32, i32, i32) {
    %c0_i32 = arith.constant 0 : i32
    %c0_i32_0 = arith.constant 0 : i32
    %c0_i32_1 = arith.constant 0 : i32
    %c0_i32_2 = arith.constant 0 : i32
    return %c0_i32, %c0_i32_0, %c0_i32_1 : i32, i32, i32
  }
  func.func @transform_4(%arg0: i32) -> (i32, i32) {
    %c0_i32 = arith.constant 0 : i32
    %c0_i32_0 = arith.constant 0 : i32
    %c0_i32_1 = arith.constant 0 : i32
    return %c0_i32, %c0_i32_0 : i32, i32
  }
  func.func @transform_5(%arg0: i32) -> (i32, i32) {
    %c0_i32 = arith.constant 0 : i32
    %c0_i32_0 = arith.constant 0 : i32
    return %arg0, %c0_i32 : i32, i32
  }
}

module attributes {stable_mosaic.version = 11 : i64} {
  func.func @_concat_linear_kernel(%arg0: i32, %arg1: memref<8x32xf32, #tpu.memory_space<vmem>>, %arg2: memref<8x32xf32, #tpu.memory_space<vmem>>, %arg3: memref<8x32xf32, #tpu.memory_space<vmem>>, %arg4: memref<3x32x32xf32, #tpu.memory_space<vmem>>, %arg5: memref<1x32xf32, #tpu.memory_space<vmem>>, %arg6: memref<8x32xf32, #tpu.memory_space<vmem>>) attributes {dimension_semantics = [#tpu.dimension_semantics<parallel>], iteration_bounds = array<i64: 2>, scalar_prefetch = 0 : i64, scratch_operands = 0 : i64, tpu.core_type = #tpu.core_type<tc>, window_params = [{transform_indices = @transform_0, window_bounds = array<i64: 8, 32>}, {transform_indices = @transform_1, window_bounds = array<i64: 8, 32>}, {transform_indices = @transform_2, window_bounds = array<i64: 8, 32>}, {pipeline_mode = #tpu.pipeline_mode<synchronous>, transform_indices = @transform_3, window_bounds = array<i64: 3, 32, 32>}, {pipeline_mode = #tpu.pipeline_mode<synchronous>, transform_indices = @transform_4, window_bounds = array<i64: 1, 32>}, {transform_indices = @transform_5, window_bounds = array<i64: 8, 32>}]} {
    %c0 = arith.constant 0 : index
    %c0_0 = arith.constant 0 : index
    %0 = vector.load %arg1[%c0, %c0_0] : memref<8x32xf32, #tpu.memory_space<vmem>>, vector<8x32xf32>
    %c0_1 = arith.constant 0 : index
    %c0_2 = arith.constant 0 : index
    %c0_3 = arith.constant 0 : index
    %1 = vector.load %arg4[%c0_1, %c0_2, %c0_3] : memref<3x32x32xf32, #tpu.memory_space<vmem>>, vector<1x32x32xf32>
    %2 = vector.shape_cast %1 : vector<1x32x32xf32> to vector<32x32xf32>
    %cst = arith.constant dense<0.000000e+00> : vector<8x32xf32>
    %3 = tpu.matmul %0, %2, %cst {dimension_numbers = #tpu.dot_dimension_numbers<[1], [0], [0], [1], [0, 0, 1, 1], [], []>} : vector<8x32xf32>, vector<32x32xf32>, vector<8x32xf32> -> vector<8x32xf32>
    %c0_4 = arith.constant 0 : index
    %c0_5 = arith.constant 0 : index
    %4 = vector.load %arg2[%c0_4, %c0_5] : memref<8x32xf32, #tpu.memory_space<vmem>>, vector<8x32xf32>
    %c1 = arith.constant 1 : index
    %c0_6 = arith.constant 0 : index
    %c0_7 = arith.constant 0 : index
    %5 = vector.load %arg4[%c1, %c0_6, %c0_7] : memref<3x32x32xf32, #tpu.memory_space<vmem>>, vector<1x32x32xf32>
    %6 = vector.shape_cast %5 : vector<1x32x32xf32> to vector<32x32xf32>
    %cst_8 = arith.constant dense<0.000000e+00> : vector<8x32xf32>
    %7 = tpu.matmul %4, %6, %cst_8 {dimension_numbers = #tpu.dot_dimension_numbers<[1], [0], [0], [1], [0, 0, 1, 1], [], []>} : vector<8x32xf32>, vector<32x32xf32>, vector<8x32xf32> -> vector<8x32xf32>
    %8 = arith.addf %3, %7 : vector<8x32xf32>
    %c0_9 = arith.constant 0 : index
    %c0_10 = arith.constant 0 : index
    %9 = vector.load %arg3[%c0_9, %c0_10] : memref<8x32xf32, #tpu.memory_space<vmem>>, vector<8x32xf32>
    %c2 = arith.constant 2 : index
    %c0_11 = arith.constant 0 : index
    %c0_12 = arith.constant 0 : index
    %10 = vector.load %arg4[%c2, %c0_11, %c0_12] : memref<3x32x32xf32, #tpu.memory_space<vmem>>, vector<1x32x32xf32>
    %11 = vector.shape_cast %10 : vector<1x32x32xf32> to vector<32x32xf32>
    %cst_13 = arith.constant dense<0.000000e+00> : vector<8x32xf32>
    %12 = tpu.matmul %9, %11, %cst_13 {dimension_numbers = #tpu.dot_dimension_numbers<[1], [0], [0], [1], [0, 0, 1, 1], [], []>} : vector<8x32xf32>, vector<32x32xf32>, vector<8x32xf32> -> vector<8x32xf32>
    %13 = arith.addf %8, %12 : vector<8x32xf32>
    %c0_14 = arith.constant 0 : index
    %c0_15 = arith.constant 0 : index
    %14 = vector.load %arg5[%c0_14, %c0_15] : memref<1x32xf32, #tpu.memory_space<vmem>>, vector<1x32xf32>
    %15 = vector.broadcast %14 : vector<1x32xf32> to vector<8x32xf32>
    %16 = arith.addf %13, %15 : vector<8x32xf32>
    %c0_16 = arith.constant 0 : index
    %c0_17 = arith.constant 0 : index
    %17 = vector.load %arg6[%c0_16, %c0_17] : memref<8x32xf32, #tpu.memory_space<vmem>>, vector<8x32xf32>
    tpu.vector_store %arg6[%c0_16, %c0_17], %16 {strides = array<i32>} : memref<8x32xf32, #tpu.memory_space<vmem>>, vector<8x32xf32>,
    return
  }
  func.func @transform_0(%arg0: i32) -> (i32, i32) {
    %c0_i32 = arith.constant 0 : i32
    %c0_i32_0 = arith.constant 0 : i32
    return %arg0, %c0_i32 : i32, i32
  }
  func.func @transform_1(%arg0: i32) -> (i32, i32) {
    %c0_i32 = arith.constant 0 : i32
    %c0_i32_0 = arith.constant 0 : i32
    return %arg0, %c0_i32 : i32, i32
  }
  func.func @transform_2(%arg0: i32) -> (i32, i32) {
    %c0_i32 = arith.constant 0 : i32
    %c0_i32_0 = arith.constant 0 : i32
    return %arg0, %c0_i32 : i32, i32
  }
  func.func @transform_3(%arg0: i32) -> (i32, i32, i32) {
    %c0_i32 = arith.constant 0 : i32
    %c0_i32_0 = arith.constant 0 : i32
    %c0_i32_1 = arith.constant 0 : i32
    %c0_i32_2 = arith.constant 0 : i32
    return %c0_i32, %c0_i32_0, %c0_i32_1 : i32, i32, i32
  }
  func.func @transform_4(%arg0: i32) -> (i32, i32) {
    %c0_i32 = arith.constant 0 : i32
    %c0_i32_0 = arith.constant 0 : i32
    %c0_i32_1 = arith.constant 0 : i32
    return %c0_i32, %c0_i32_0 : i32, i32
  }
  func.func @transform_5(%arg0: i32) -> (i32, i32) {
    %c0_i32 = arith.constant 0 : i32
    %c0_i32_0 = arith.constant 0 : i32
    return %arg0, %c0_i32 : i32, i32
  }
}

</mosaic_0001>

<llo_original>
// kernel: tpu_custom_call.1
$region0: #{tpu_custom_call.1}
  #allocation0 [shape = 'u32[]', space=smem, size = 0x4, offset = 0x4, fixed_abs, tag = 'smem constant byte address 0x4 - core index']
  #allocation1 [shape = 'u32[144,128]{1,0:T(1,128)}', space=vmem, size = 0x12000, scoped, tag = 'internal scratch']
  %s0 = inlined_call_operand.hbm [shape: f32[16,32], index: 0, kind: input, shape index: {}]
  %s1 = inlined_call_operand.hbm [shape: f32[16,32], index: 1, kind: input, shape index: {}]
  %s2 = inlined_call_operand.hbm [shape: f32[16,32], index: 2, kind: input, shape index: {}]
  %s3 = inlined_call_operand.hbm [shape: f32[3,32,32], index: 3, kind: input, shape index: {}]
  %s4 = inlined_call_operand.vmem [shape: f32[1,32], index: 4, kind: input, shape index: {}]
  %s5 = inlined_call_operand.hbm [shape: f32[16,32], index: 5, kind: output, shape index: {}]
  %s6 = sld [smem:[#allocation0]]
  $region69: #{tpu_custom_call.1} parent=0
    _
  %s8 = ssub.s32 1, %s6
  %s9 = scalar_select 0, %s8, %s6
  $region1: #{tpu_custom_call.1} parent=0
    #allocation2 [shape = 'u8[8192]{0}', space=vmem, size = 0x2000, scoped, tag = 'input window, operand 0']
    #allocation3 [shape = 's32[2]{0}', space=sflag, size = 0x8, scoped, tag = 'scoped memory for tpu_custom_call.1']
    #allocation4 [shape = 's32[2]{0}', space=sflag, size = 0x8, scoped, tag = 'scoped memory for tpu_custom_call.1']
    #allocation5 [shape = 'u8[8192]{0}', space=vmem, size = 0x2000, scoped, tag = 'input window, operand 1']
    #allocation6 [shape = 's32[2]{0}', space=sflag, size = 0x8, scoped, tag = 'scoped memory for tpu_custom_call.1']
    #allocation7 [shape = 'u8[8192]{0}', space=vmem, size = 0x2000, scoped, tag = 'input window, operand 2']
    #allocation8 [shape = 'u8[49152]{0}', space=vmem, size = 0xc000, scoped, tag = 'input window, operand 3, single buffered']
    #allocation9 [shape = 's32[1]{0}', space=sflag, size = 0x4, scoped, tag = 'scoped memory for tpu_custom_call.1']
    #allocation10 [shape = 'u8[8192]{0}', space=vmem, size = 0x2000, scoped, tag = 'output window, operand 0']
    %10 = vsyncpa [#allocation3], 0
    %s11 = scalar_lea.sflag [#allocation3], 1
    %12 = vsyncpa %s11, 0
    %13 = vsyncpa [#allocation6], 0
    %s14 = scalar_lea.sflag [#allocation6], 1
    %15 = vsyncpa %s14, 0
    %16 = vsyncpa [#allocation9], 0
    %17 = vsyncpa [#allocation4], 0
    %s18 = scalar_lea.sflag [#allocation4], 1
    %19 = vsyncpa %s18, 0
    loop: start=0, step=1, limit=4
    $region2: #{tpu_custom_call.1} parent=1 // loop_pre_header
      _
    $region3: #{tpu_custom_call.1} parent=1 // loop_header
      %s21 = sphi 0, %s25
      %p22 = scmp.ge.s32.totalorder %s21, 4
      %s31 = sphi 0, %s33
      %s34 = sphi 0, %s31
      %s35 = sphi 0, %s34
      %s51 = sphi 0, %s35
      %s57 = sphi 0, %s59
      %s60 = sphi 0, %s57
      %s61 = sphi 0, %s60
      %s77 = sphi 0, %s61
      %s83 = sphi 0, %s85
      %s86 = sphi 0, %s83
      %s87 = sphi 0, %s86
      %s103 = sphi 0, %s87
      %s107 = sphi 0, %s107
      %s109 = sphi 0, %s107
      %s110 = sphi 0, %s109
      %s124 = sphi 0, %s110
      %s128 = sphi 0, %s128
      %s130 = sphi 0, %s128
      %s131 = sphi 0, %s130
      %s145 = sphi 0, %s131
      %s151 = sphi 0, %s153
      %s154 = sphi 0, %s151
      %s155 = sphi 0, %s154
      %s171 = sphi 0, %s155
    $region4: #{tpu_custom_call.1} parent=1 // loop_header_branch
      %24 = sbr.rel (%p22) target = $region8
    $region5: #{tpu_custom_call.1} parent=1 // loop_body
      %s26 = ssub.s32 %s21, 1
      %s27 = ssub.s32 %s21, 2
      %s28 = sadd.s32 %s21, 1
      %s29 = ssub.s32 %s21, %s28
      %p30 = scmp.eq.s32.totalorder %s29, 0
      %s32 = sadd.s32 %s31, 1
      %s33 = scalar_select %p30, %s31, %s32
      %p36 = pneg %p30
      %p37 = scmp.eq.s32.totalorder %s21, 1
      %p38 = por %p36, %p37
      %p39 = scmp.ne.s32.totalorder %s31, %s34
      %p40 = scmp.eq.s32.totalorder %s21, 0
      %p41 = por %p39, %p40
      %p42 = scmp.ne.s32.totalorder %s31, %s34
      %p43 = scmp.eq.s32.totalorder %s26, 1
      %p44 = por %p42, %p43
      %p45 = scmp.ne.s32.totalorder %s34, %s35
      %p46 = scmp.eq.s32.totalorder %s26, 0
      %p47 = por %p45, %p46
      %p48 = scmp.ne.s32.totalorder %s34, %s35
      %p49 = scmp.eq.s32.totalorder %s27, 1
      %p50 = por %p48, %p49
      %p52 = scmp.ne.s32.totalorder %s35, %s51
      %p53 = scmp.eq.s32.totalorder %s27, 0
      %p54 = por %p52, %p53
      %s55 = ssub.s32 %s21, %s28
      %p56 = scmp.eq.s32.totalorder %s55, 0
      %s58 = sadd.s32 %s57, 1
      %s59 = scalar_select %p56, %s57, %s58
      %p62 = pneg %p56
      %p63 = scmp.eq.s32.totalorder %s21, 1
      %p64 = por %p62, %p63
      %p65 = scmp.ne.s32.totalorder %s57, %s60
      %p66 = scmp.eq.s32.totalorder %s21, 0
      %p67 = por %p65, %p66
      %p68 = scmp.ne.s32.totalorder %s57, %s60
      %p69 = scmp.eq.s32.totalorder %s26, 1
      %p70 = por %p68, %p69
      %p71 = scmp.ne.s32.totalorder %s60, %s61
      %p72 = scmp.eq.s32.totalorder %s26, 0
      %p73 = por %p71, %p72
      %p74 = scmp.ne.s32.totalorder %s60, %s61
      %p75 = scmp.eq.s32.totalorder %s27, 1
      %p76 = por %p74, %p75
      %p78 = scmp.ne.s32.totalorder %s61, %s77
      %p79 = scmp.eq.s32.totalorder %s27, 0
      %p80 = por %p78, %p79
      %s81 = ssub.s32 %s21, %s28
      %p82 = scmp.eq.s32.totalorder %s81, 0
      %s84 = sadd.s32 %s83, 1
      %s85 = scalar_select %p82, %s83, %s84
      %p88 = pneg %p82
      %p89 = scmp.eq.s32.totalorder %s21, 1
      %p90 = por %p88, %p89
      %p91 = scmp.ne.s32.totalorder %s83, %s86
      %p92 = scmp.eq.s32.totalorder %s21, 0
      %p93 = por %p91, %p92
      %p94 = scmp.ne.s32.totalorder %s83, %s86
      %p95 = scmp.eq.s32.totalorder %s26, 1
      %p96 = por %p94, %p95
      %p97 = scmp.ne.s32.totalorder %s86, %s87
      %p98 = scmp.eq.s32.totalorder %s26, 0
      %p99 = por %p97, %p98
      %p100 = scmp.ne.s32.totalorder %s86, %s87
      %p101 = scmp.eq.s32.totalorder %s27, 1
      %p102 = por %p100, %p101
      %p104 = scmp.ne.s32.totalorder %s87, %s103
      %p105 = scmp.eq.s32.totalorder %s27, 0
      %p106 = por %p104, %p105
      %s108 = sadd.s32 %s107, 1
      %p111 = scmp.eq.s32.totalorder %s21, 1
      %p112 = scmp.ne.s32.totalorder %s107, %s109
      %p113 = scmp.eq.s32.totalorder %s21, 0
      %p114 = por %p112, %p113
      %p115 = scmp.ne.s32.totalorder %s107, %s109
      %p116 = scmp.eq.s32.totalorder %s26, 1
      %p117 = por %p115, %p116
      %p118 = scmp.ne.s32.totalorder %s109, %s110
      %p119 = scmp.eq.s32.totalorder %s26, 0
      %p120 = por %p118, %p119
      %p121 = scmp.ne.s32.totalorder %s109, %s110
      %p122 = scmp.eq.s32.totalorder %s27, 1
      %p123 = por %p121, %p122
      %p125 = scmp.ne.s32.totalorder %s110, %s124
      %p126 = scmp.eq.s32.totalorder %s27, 0
      %p127 = por %p125, %p126
      %s129 = sadd.s32 %s128, 1
      %p132 = scmp.eq.s32.totalorder %s21, 1
      %p133 = scmp.ne.s32.totalorder %s128, %s130
      %p134 = scmp.eq.s32.totalorder %s21, 0
      %p135 = por %p133, %p134
      %p136 = scmp.ne.s32.totalorder %s128, %s130
      %p137 = scmp.eq.s32.totalorder %s26, 1
      %p138 = por %p136, %p137
      %p139 = scmp.ne.s32.totalorder %s130, %s131
      %p140 = scmp.eq.s32.totalorder %s26, 0
      %p141 = por %p139, %p140
      %p142 = scmp.ne.s32.totalorder %s130, %s131
      %p143 = scmp.eq.s32.totalorder %s27, 1
      %p144 = por %p142, %p143
      %p146 = scmp.ne.s32.totalorder %s131, %s145
      %p147 = scmp.eq.s32.totalorder %s27, 0
      %p148 = por %p146, %p147
      %s149 = ssub.s32 %s21, %s28
      %p150 = scmp.eq.s32.totalorder %s149, 0
      %s152 = sadd.s32 %s151, 1
      %s153 = scalar_select %p150, %s151, %s152
      %p156 = pneg %p150
      %p157 = scmp.eq.s32.totalorder %s21, 1
      %p158 = por %p156, %p157
      %p159 = scmp.ne.s32.totalorder %s151, %s154
      %p160 = scmp.eq.s32.totalorder %s21, 0
      %p161 = por %p159, %p160
      %p162 = scmp.ne.s32.totalorder %s151, %s154
      %p163 = scmp.eq.s32.totalorder %s26, 1
      %p164 = por %p162, %p163
      %p165 = scmp.ne.s32.totalorder %s154, %s155
      %p166 = scmp.eq.s32.totalorder %s26, 0
      %p167 = por %p165, %p166
      %p168 = scmp.ne.s32.totalorder %s154, %s155
      %p169 = scmp.eq.s32.totalorder %s27, 1
      %p170 = por %p168, %p169
      %p172 = scmp.ne.s32.totalorder %s155, %s171
      %p173 = scmp.eq.s32.totalorder %s27, 0
      %p174 = por %p172, %p173
      %p175 = scmp.le.s32.totalorder 1, %s21
      %p176 = scmp.lt.s32.totalorder %s21, 3
      %p177 = pnand %p175, %p176
      %p178 = pneg %p177
      // Predicated region
      $region9: #{tpu_custom_call.1} parent=5 // pred_check
        _
      $region10: #{tpu_custom_call.1} parent=5 // pred_check_branch
        %180 = sbr.rel (%p177) target = $region12
      $region11: #{tpu_custom_call.1} parent=5 // pred_region
        %s181 = ssub.s32 %s21, 1
        // Predicated region
        $region13: #{tpu_custom_call.1} parent=11 // pred_check
          %p182 = pneg %p120
        $region14: #{tpu_custom_call.1} parent=11 // pred_check_branch
          %184 = sbr.rel (%p182) target = $region16
        $region15: #{tpu_custom_call.1} parent=11 // pred_region
          %s186 = ssub.s32 1536, 1536
          %187 = vsyncadd [#allocation9], %s186
          %s188 = sshll.u32 [#allocation8], 4
          %s189 = int_to_ptr.vmem [resolvable:$true] %s188
          %194 = dma.hbm_to_vmem [thread:$0]  %s3, 1536, %s189, [#allocation9], 128, 128, 8
        $region16: #{tpu_custom_call.1} parent=11 // pred_fallthru
          _
        // Predicated region
        $region17: #{tpu_custom_call.1} parent=11 // pred_check
          %p195 = pneg %p141
        $region18: #{tpu_custom_call.1} parent=11 // pred_check_branch
          %197 = sbr.rel (%p195) target = $region20
        $region19: #{tpu_custom_call.1} parent=11 // pred_region
          _
        $region20: #{tpu_custom_call.1} parent=11 // pred_fallthru
          _
      $region12: #{tpu_custom_call.1} parent=5 // pred_fallthru
        _
      %p198 = scmp.lt.s32.totalorder %s21, 2
      // Predicated region
      $region21: #{tpu_custom_call.1} parent=5 // pred_check
        %p199 = pneg %p198
      $region22: #{tpu_custom_call.1} parent=5 // pred_check_branch
        %201 = sbr.rel (%p199) target = $region24
      $region23: #{tpu_custom_call.1} parent=5 // pred_region
        // Predicated region
        $region25: #{tpu_custom_call.1} parent=23 // pred_check
          %p202 = pneg %p41
        $region26: #{tpu_custom_call.1} parent=23 // pred_check_branch
          %204 = sbr.rel (%p202) target = $region28
        $region27: #{tpu_custom_call.1} parent=23 // pred_region
          %s205 = sand.u32 %s31, 1
          %s206 = scalar_lea.sflag [#allocation3], %s205
          %s207 = sand.u32 %s31, 1
          %s208 = smul.addr %s207, 8
          %s209 = scalar_lea.vmem [#allocation2], %s208
          %s211 = ssub.s32 128, 128
          %212 = vsyncadd %s206, %s211
          %s213 = smul.addr %s21, 128
          %s214 = scalar_lea.hbm %s0, %s213
          %s216 = sshll.u32 %s209, 4
          %s217 = int_to_ptr.vmem [resolvable:$true] %s216
          %219 = dma.hbm_to_vmem [thread:$0]  %s214, 128, %s217, %s206
        $region28: #{tpu_custom_call.1} parent=23 // pred_fallthru
          _
        // Predicated region
        $region29: #{tpu_custom_call.1} parent=23 // pred_check
          %p220 = pneg %p67
        $region30: #{tpu_custom_call.1} parent=23 // pred_check_branch
          %222 = sbr.rel (%p220) target = $region32
        $region31: #{tpu_custom_call.1} parent=23 // pred_region
          %s223 = sand.u32 %s21, 1
          %s224 = scalar_lea.sflag [#allocation6], %s223
          %s225 = sand.u32 %s57, 1
          %s226 = smul.addr %s225, 8
          %s227 = scalar_lea.vmem [#allocation5], %s226
          %s229 = ssub.s32 128, 128
          %230 = vsyncadd %s224, %s229
          %s231 = smul.addr %s21, 128
          %s232 = scalar_lea.hbm %s1, %s231
          %s234 = sshll.u32 %s227, 4
          %s235 = int_to_ptr.vmem [resolvable:$true] %s234
          %237 = dma.hbm_to_vmem [thread:$0]  %s232, 128, %s235, %s224
        $region32: #{tpu_custom_call.1} parent=23 // pred_fallthru
          _
        // Predicated region
        $region33: #{tpu_custom_call.1} parent=23 // pred_check
          %p238 = pneg %p93
        $region34: #{tpu_custom_call.1} parent=23 // pred_check_branch
          %240 = sbr.rel (%p238) target = $region36
        $region35: #{tpu_custom_call.1} parent=23 // pred_region
          %s241 = sand.u32 %s21, 1
          %s242 = scalar_lea.sflag [#allocation6], %s241
          %s243 = sand.u32 %s83, 1
          %s244 = smul.addr %s243, 8
          %s245 = scalar_lea.vmem [#allocation7], %s244
          %s247 = ssub.s32 128, 128
          %248 = vsyncadd %s242, %s247
          %s249 = smul.addr %s21, 128
          %s250 = scalar_lea.hbm %s2, %s249
          %s252 = sshll.u32 %s245, 4
          %s253 = int_to_ptr.vmem [resolvable:$true] %s252
          %255 = dma.hbm_to_vmem [thread:$0]  %s250, 128, %s253, %s242
        $region36: #{tpu_custom_call.1} parent=23 // pred_fallthru
          _
      $region24: #{tpu_custom_call.1} parent=5 // pred_fallthru
        _
      %p256 = scmp.le.s32.totalorder 1, %s21
      %p257 = scmp.lt.s32.totalorder %s21, 3
      %p258 = pnand %p256, %p257
      %p259 = pneg %p258
      // Predicated region
      $region37: #{tpu_custom_call.1} parent=5 // pred_check
        _
      $region38: #{tpu_custom_call.1} parent=5 // pred_check_branch
        %261 = sbr.rel (%p258) target = $region40
      $region39: #{tpu_custom_call.1} parent=5 // pred_region
        %s262 = ssub.s32 %s21, 1
        %s263 = sand.u32 %s34, 1
        %s264 = scalar_lea.sflag [#allocation3], %s263
        %s265 = sand.u32 %s34, 1
        %s266 = smul.addr %s265, 8
        %s267 = scalar_lea.vmem [#allocation2], %s266
        // Predicated region
        $region41: #{tpu_custom_call.1} parent=39 // pred_check
          %p268 = pneg %p47
        $region42: #{tpu_custom_call.1} parent=39 // pred_check_branch
          %270 = sbr.rel (%p268) target = $region44
        $region43: #{tpu_custom_call.1} parent=39 // pred_region
          %271 = dma.done %s264, 128
        $region44: #{tpu_custom_call.1} parent=39 // pred_fallthru
          _
        %s272 = sand.u32 %s26, 1
        %s273 = scalar_lea.sflag [#allocation6], %s272
        %s274 = sand.u32 %s60, 1
        %s275 = smul.addr %s274, 8
        %s276 = scalar_lea.vmem [#allocation5], %s275
        // Predicated region
        $region45: #{tpu_custom_call.1} parent=39 // pred_check
          %p277 = pneg %p73
        $region46: #{tpu_custom_call.1} parent=39 // pred_check_branch
          %279 = sbr.rel (%p277) target = $region48
        $region47: #{tpu_custom_call.1} parent=39 // pred_region
          %280 = dma.done %s273, 128
        $region48: #{tpu_custom_call.1} parent=39 // pred_fallthru
          _
        %s281 = sand.u32 %s26, 1
        %s282 = scalar_lea.sflag [#allocation6], %s281
        %s283 = sand.u32 %s86, 1
        %s284 = smul.addr %s283, 8
        %s285 = scalar_lea.vmem [#allocation7], %s284
        // Predicated region
        $region49: #{tpu_custom_call.1} parent=39 // pred_check
          %p286 = pneg %p99
        $region50: #{tpu_custom_call.1} parent=39 // pred_check_branch
          %288 = sbr.rel (%p286) target = $region52
        $region51: #{tpu_custom_call.1} parent=39 // pred_region
          %289 = dma.done %s282, 128
        $region52: #{tpu_custom_call.1} parent=39 // pred_fallthru
          _
        // Predicated region
        $region53: #{tpu_custom_call.1} parent=39 // pred_check
          %p290 = pneg %p120
        $region54: #{tpu_custom_call.1} parent=39 // pred_check_branch
          %292 = sbr.rel (%p290) target = $region56
        $region55: #{tpu_custom_call.1} parent=39 // pred_region
          %293 = dma.done [#allocation9], 1536
        $region56: #{tpu_custom_call.1} parent=39 // pred_fallthru
          _
        %s294 = sand.u32 %s34, 1
        %s295 = scalar_lea.sflag [#allocation3], %s294
        %s296 = sand.u32 %s34, 1
        %s297 = smul.addr %s296, 8
        %s298 = scalar_lea.vmem [#allocation2], %s297
        %p299 = pneg %p47
        %p300 = pneg %p44
        %s301 = sand.u32 %s26, 1
        %s302 = scalar_lea.sflag [#allocation6], %s301
        %s303 = sand.u32 %s60, 1
        %s304 = smul.addr %s303, 8
        %s305 = scalar_lea.vmem [#allocation5], %s304
        %p306 = pneg %p73
        %p307 = pneg %p70
        %s308 = sand.u32 %s26, 1
        %s309 = scalar_lea.sflag [#allocation6], %s308
        %s310 = sand.u32 %s86, 1
        %s311 = smul.addr %s310, 8
        %s312 = scalar_lea.vmem [#allocation7], %s311
        %p313 = pneg %p99
        %p314 = pneg %p96
        %p315 = pneg %p120
        %p316 = pneg %p117
        %p317 = pneg %p141
        %p318 = pneg %p138
        %p319 = pneg %p167
        %p320 = pneg %p164
        %s321 = sand.u32 %s154, 1
        %s322 = scalar_lea.sflag [#allocation4], %s321
        %s323 = sand.u32 %s154, 1
        %s324 = smul.addr %s323, 8
        %s325 = scalar_lea.vmem [#allocation10], %s324
        %v326 = vld [vmem:[%s267] sm:$0xff]
        %v327 = vld [vmem:[#allocation8] sm:$0xff]
        %v328 = vld [vmem:[#allocation8 + $0x8] sm:$0xff]
        %v329 = vld [vmem:[#allocation8 + $0x10] sm:$0xff]
        %v330 = vld [vmem:[#allocation8 + $0x18] sm:$0xff]
        %v331 = vld [vmem:[%s276] sm:$0xff]
        %s332 = scalar_lea.vmem [#allocation8], 32
        %v333 = vld [vmem:[%s332] sm:$0xff]
        %v334 = vld [vmem:[%s332 + $0x8] sm:$0xff]
        %v335 = vld [vmem:[%s332 + $0x10] sm:$0xff]
        %v336 = vld [vmem:[%s332 + $0x18] sm:$0xff]
        %vm337 = vcmask 261120
        %v339 = vsel %vm337, %v331, 0
        %341 = vmatprep.subr.mxu0 0.0
        %342 = vmatpush1.msra.mxu0 %v333
        %343 = vmatprep.subr.mxu0 0.0
        %344 = vmatpush1.msra.mxu0 %v334
        %345 = vmatprep.subr.mxu0 0.0
        %346 = vmatpush1.msra.mxu0 %v335
        %347 = vmatprep.subr.mxu0 0.0
        %348 = vmatpush1.msra.mxu0 %v336
        %349 = vmatprep.subr.mxu0 0.0
        %350 = vmatpush1.msra.mxu0 0.0
        %351 = vmatprep.subr.mxu0 0.0
        %352 = vmatpush1.msra.mxu0 0.0
        %353 = vmatprep.subr.mxu0 0.0
        %354 = vmatpush1.msra.mxu0 0.0
        %355 = vmatprep.subr.mxu0 0.0
        %356 = vmatpush1.msra.mxu0 0.0
        %357 = vmatprep.subr.mxu0 0.0
        %358 = vmatpush1.msra.mxu0 0.0
        %359 = vmatprep.subr.mxu0 0.0
        %360 = vmatpush1.msra.mxu0 0.0
        %361 = vmatprep.subr.mxu0 0.0
        %362 = vmatpush1.msra.mxu0 0.0
        %363 = vmatprep.subr.mxu0 0.0
        %364 = vmatpush1.msra.mxu0 0.0
        %365 = vmatprep.subr.mxu0 0.0
        %366 = vmatpush1.msra.mxu0 0.0
        %367 = vmatprep.subr.mxu0 0.0
        %368 = vmatpush1.msra.mxu0 0.0
        %369 = vmatprep.subr.mxu0 0.0
        %370 = vmatpush1.msra.mxu0 0.0
        %371 = vmatprep.subr.mxu0 0.0
        %372 = vmatpush1.msra.mxu0 0.0
        %373 = vmatprep.subr.mxu0 0.0
        %374 = vmatpush1.msra.mxu0 0.0
        %375 = vmatprep.subr.mxu0 0.0
        %376 = vmatpush1.msra.mxu0 0.0
        %377 = vmatprep.subr.mxu0 0.0
        %378 = vmatpush1.msra.mxu0 0.0
        %379 = vmatprep.subr.mxu0 0.0
        %380 = vmatpush1.msra.mxu0 0.0
        %381 = vmatprep.subr.mxu0 0.0
        %382 = vmatpush1.msra.mxu0 0.0
        %383 = vmatprep.subr.mxu0 0.0
        %384 = vmatpush1.msra.mxu0 0.0
        %385 = vmatprep.subr.mxu0 0.0
        %386 = vmatpush1.msra.mxu0 0.0
        %387 = vmatprep.subr.mxu0 0.0
        %388 = vmatpush1.msra.mxu0 0.0
        %389 = vmatprep.subr.mxu0 0.0
        %390 = vmatpush1.msra.mxu0 0.0
        %391 = vmatprep.subr.mxu0 0.0
        %392 = vmatpush1.msra.mxu0 0.0
        %393 = vmatprep.subr.mxu0 0.0
        %394 = vmatpush1.msra.mxu0 0.0
        %395 = vmatprep.subr.mxu0 0.0
        %396 = vmatpush1.msra.mxu0 0.0
        %397 = vmatprep.subr.mxu0 0.0
        %398 = vmatpush1.msra.mxu0 0.0
        %399 = vmatprep.subr.mxu0 0.0
        %400 = vmatpush1.msra.mxu0 0.0
        %401 = vmatprep.subr.mxu0 0.0
        %402 = vmatpush1.msra.mxu0 0.0
        %403 = vmatprep.subr.mxu0 0.0
        %404 = vmatpush1.msra.mxu0 0.0
        %405 = vmatprep.mubr.f32.mxu0 0.0
        %406 = vmatmul.mubr.f32.gmra.mrb[0].mxu0 %v339
        %v407 = vpop.f32.mrb[0].mxu0
        %v408 = vadd.f32 0.0, %v407
        %v409 = vpop.f32.mrb[0].mxu0
        %410 = vdwg.mxu0
        %v412 = vsel %vm337, %v326, 0
        %414 = vmatprep.subr.mxu0 0.0
        %415 = vmatpush1.msra.mxu0 %v327
        %416 = vmatprep.subr.mxu0 0.0
        %417 = vmatpush1.msra.mxu0 %v328
        %418 = vmatprep.subr.mxu0 0.0
        %419 = vmatpush1.msra.mxu0 %v329
        %420 = vmatprep.subr.mxu0 0.0
        %421 = vmatpush1.msra.mxu0 %v330
        %422 = vmatprep.subr.mxu0 0.0
        %423 = vmatpush1.msra.mxu0 0.0
        %424 = vmatprep.subr.mxu0 0.0
        %425 = vmatpush1.msra.mxu0 0.0
        %426 = vmatprep.subr.mxu0 0.0
        %427 = vmatpush1.msra.mxu0 0.0
        %428 = vmatprep.subr.mxu0 0.0
        %429 = vmatpush1.msra.mxu0 0.0
        %430 = vmatprep.subr.mxu0 0.0
        %431 = vmatpush1.msra.mxu0 0.0
        %432 = vmatprep.subr.mxu0 0.0
        %433 = vmatpush1.msra.mxu0 0.0
        %434 = vmatprep.subr.mxu0 0.0
        %435 = vmatpush1.msra.mxu0 0.0
        %436 = vmatprep.subr.mxu0 0.0
        %437 = vmatpush1.msra.mxu0 0.0
        %438 = vmatprep.subr.mxu0 0.0
        %439 = vmatpush1.msra.mxu0 0.0
        %440 = vmatprep.subr.mxu0 0.0
        %441 = vmatpush1.msra.mxu0 0.0
        %442 = vmatprep.subr.mxu0 0.0
        %443 = vmatpush1.msra.mxu0 0.0
        %444 = vmatprep.subr.mxu0 0.0
        %445 = vmatpush1.msra.mxu0 0.0
        %446 = vmatprep.subr.mxu0 0.0
        %447 = vmatpush1.msra.mxu0 0.0
        %448 = vmatprep.subr.mxu0 0.0
        %449 = vmatpush1.msra.mxu0 0.0
        %450 = vmatprep.subr.mxu0 0.0
        %451 = vmatpush1.msra.mxu0 0.0
        %452 = vmatprep.subr.mxu0 0.0
        %453 = vmatpush1.msra.mxu0 0.0
        %454 = vmatprep.subr.mxu0 0.0
        %455 = vmatpush1.msra.mxu0 0.0
        %456 = vmatprep.subr.mxu0 0.0
        %457 = vmatpush1.msra.mxu0 0.0
        %458 = vmatprep.subr.mxu0 0.0
        %459 = vmatpush1.msra.mxu0 0.0
        %460 = vmatprep.subr.mxu0 0.0
        %461 = vmatpush1.msra.mxu0 0.0
        %462 = vmatprep.subr.mxu0 0.0
        %463 = vmatpush1.msra.mxu0 0.0
        %464 = vmatprep.subr.mxu0 0.0
        %465 = vmatpush1.msra.mxu0 0.0
        %466 = vmatprep.subr.mxu0 0.0
        %467 = vmatpush1.msra.mxu0 0.0
        %468 = vmatprep.subr.mxu0 0.0
        %469 = vmatpush1.msra.mxu0 0.0
        %470 = vmatprep.subr.mxu0 0.0
        %471 = vmatpush1.msra.mxu0 0.0
        %472 = vmatprep.subr.mxu0 0.0
        %473 = vmatpush1.msra.mxu0 0.0
        %474 = vmatprep.subr.mxu0 0.0
        %475 = vmatpush1.msra.mxu0 0.0
        %476 = vmatprep.subr.mxu0 0.0
        %477 = vmatpush1.msra.mxu0 0.0
        %478 = vmatprep.mubr.f32.mxu0 0.0
        %479 = vmatmul.mubr.f32.gmra.mrb[0].mxu0 %v412
        %v480 = vpop.f32.mrb[0].mxu0
        %v481 = vadd.f32 %v408, %v480
        %v482 = vpop.f32.mrb[0].mxu0
        %483 = vdwg.mxu0
        %v484 = vld [vmem:[%s285] sm:$0xff]
        %s485 = scalar_lea.vmem [#allocation8], 64
        %v486 = vld [vmem:[%s485] sm:$0xff]
        %v487 = vld [vmem:[%s485 + $0x8] sm:$0xff]
        %v488 = vld [vmem:[%s485 + $0x10] sm:$0xff]
        %v489 = vld [vmem:[%s485 + $0x18] sm:$0xff]
        %v491 = vsel %vm337, %v484, 0
        %493 = vmatprep.subr.mxu0 0.0
        %494 = vmatpush1.msra.mxu0 %v486
        %495 = vmatprep.subr.mxu0 0.0
        %496 = vmatpush1.msra.mxu0 %v487
        %497 = vmatprep.subr.mxu0 0.0
        %498 = vmatpush1.msra.mxu0 %v488
        %499 = vmatprep.subr.mxu0 0.0
        %500 = vmatpush1.msra.mxu0 %v489
        %501 = vmatprep.subr.mxu0 0.0
        %502 = vmatpush1.msra.mxu0 0.0
        %503 = vmatprep.subr.mxu0 0.0
        %504 = vmatpush1.msra.mxu0 0.0
        %505 = vmatprep.subr.mxu0 0.0
        %506 = vmatpush1.msra.mxu0 0.0
        %507 = vmatprep.subr.mxu0 0.0
        %508 = vmatpush1.msra.mxu0 0.0
        %509 = vmatprep.subr.mxu0 0.0
        %510 = vmatpush1.msra.mxu0 0.0
        %511 = vmatprep.subr.mxu0 0.0
        %512 = vmatpush1.msra.mxu0 0.0
        %513 = vmatprep.subr.mxu0 0.0
        %514 = vmatpush1.msra.mxu0 0.0
        %515 = vmatprep.subr.mxu0 0.0
        %516 = vmatpush1.msra.mxu0 0.0
        %517 = vmatprep.subr.mxu0 0.0
        %518 = vmatpush1.msra.mxu0 0.0
        %519 = vmatprep.subr.mxu0 0.0
        %520 = vmatpush1.msra.mxu0 0.0
        %521 = vmatprep.subr.mxu0 0.0
        %522 = vmatpush1.msra.mxu0 0.0
        %523 = vmatprep.subr.mxu0 0.0
        %524 = vmatpush1.msra.mxu0 0.0
        %525 = vmatprep.subr.mxu0 0.0
        %526 = vmatpush1.msra.mxu0 0.0
        %527 = vmatprep.subr.mxu0 0.0
        %528 = vmatpush1.msra.mxu0 0.0
        %529 = vmatprep.subr.mxu0 0.0
        %530 = vmatpush1.msra.mxu0 0.0
        %531 = vmatprep.subr.mxu0 0.0
        %532 = vmatpush1.msra.mxu0 0.0
        %533 = vmatprep.subr.mxu0 0.0
        %534 = vmatpush1.msra.mxu0 0.0
        %535 = vmatprep.subr.mxu0 0.0
        %536 = vmatpush1.msra.mxu0 0.0
        %537 = vmatprep.subr.mxu0 0.0
        %538 = vmatpush1.msra.mxu0 0.0
        %539 = vmatprep.subr.mxu0 0.0
        %540 = vmatpush1.msra.mxu0 0.0
        %541 = vmatprep.subr.mxu0 0.0
        %542 = vmatpush1.msra.mxu0 0.0
        %543 = vmatprep.subr.mxu0 0.0
        %544 = vmatpush1.msra.mxu0 0.0
        %545 = vmatprep.subr.mxu0 0.0
        %546 = vmatpush1.msra.mxu0 0.0
        %547 = vmatprep.subr.mxu0 0.0
        %548 = vmatpush1.msra.mxu0 0.0
        %549 = vmatprep.subr.mxu0 0.0
        %550 = vmatpush1.msra.mxu0 0.0
        %551 = vmatprep.subr.mxu0 0.0
        %552 = vmatpush1.msra.mxu0 0.0
        %553 = vmatprep.subr.mxu0 0.0
        %554 = vmatpush1.msra.mxu0 0.0
        %555 = vmatprep.subr.mxu0 0.0
        %556 = vmatpush1.msra.mxu0 0.0
        %557 = vmatprep.mubr.f32.mxu0 0.0
        %558 = vmatmul.mubr.f32.gmra.mrb[0].mxu0 %v491
        %v559 = vpop.f32.mrb[0].mxu0
        %v560 = vadd.f32 0.0, %v559
        %v561 = vpop.f32.mrb[0].mxu0
        %562 = vdwg.mxu0
        %v563 = vadd.f32 %v481, %v560
        %v564 = vld [vmem:[%s4] sm:$0x1]
        %v566 = vlaneseq
        %v567 = vshrl.u32 %v566, 7
        %v568 = vsub.s32 0, %v567
        %v569 = vrot.slane %v564, %v568
        %v571 = vadd.f32 %v563, %v569
        %572 = vst.msk [vmem:[%s325] sm:$0xff] %vm337, %v571
        %s573 = sand.u32 %s154, 1
        %s574 = scalar_lea.sflag [#allocation4], %s573
        %s575 = sand.u32 %s154, 1
        %s576 = smul.addr %s575, 8
        %s577 = scalar_lea.vmem [#allocation10], %s576
        // Predicated region
        $region57: #{tpu_custom_call.1} parent=39 // pred_check
          %p578 = pneg %p164
        $region58: #{tpu_custom_call.1} parent=39 // pred_check_branch
          %580 = sbr.rel (%p578) target = $region60
        $region59: #{tpu_custom_call.1} parent=39 // pred_region
          %s582 = ssub.s32 128, 128
          %583 = vsyncadd %s574, %s582
          %s584 = smul.addr %s26, 128
          %s585 = scalar_lea.hbm %s5, %s584
          %s587 = sshll.u32 %s577, 4
          %s588 = int_to_ptr.vmem [resolvable:$true] %s587
          %590 = dma.vmem_to_hbm [thread:$0]  %s588, 128, %s585, %s574
        $region60: #{tpu_custom_call.1} parent=39 // pred_fallthru
          _
      $region40: #{tpu_custom_call.1} parent=5 // pred_fallthru
        _
      %p591 = scmp.le.s32.totalorder 2, %s21
      // Predicated region
      $region61: #{tpu_custom_call.1} parent=5 // pred_check
        %p592 = pneg %p591
      $region62: #{tpu_custom_call.1} parent=5 // pred_check_branch
        %594 = sbr.rel (%p592) target = $region64
      $region63: #{tpu_custom_call.1} parent=5 // pred_region
        %s595 = ssub.s32 %s21, 2
        // Predicated region
        $region65: #{tpu_custom_call.1} parent=63 // pred_check
          %p596 = pneg %p170
        $region66: #{tpu_custom_call.1} parent=63 // pred_check_branch
          %598 = sbr.rel (%p596) target = $region68
        $region67: #{tpu_custom_call.1} parent=63 // pred_region
          %s599 = sand.u32 %s155, 1
          %s600 = scalar_lea.sflag [#allocation4], %s599
          %s601 = sand.u32 %s155, 1
          %s602 = smul.addr %s601, 8
          %s603 = scalar_lea.vmem [#allocation10], %s602
          %604 = dma.done %s600, 128
        $region68: #{tpu_custom_call.1} parent=63 // pred_fallthru
          _
      $region64: #{tpu_custom_call.1} parent=5 // pred_fallthru
        _
    $region6: #{tpu_custom_call.1} parent=1 // loop_footer
      %s25 = sadd.s32 1, %s21
    $region7: #{tpu_custom_call.1} parent=1 // loop_footer_branch
      %20 = sbr.rel target = $region3
    $region8: #{tpu_custom_call.1} parent=1 // loop_exit
      _
    %605 = vsyncpa [#allocation3], 1
    %s606 = scalar_lea.sflag [#allocation3], 1
    %607 = vsyncpa %s606, 1
    %608 = vsyncpa [#allocation6], 1
    %s609 = scalar_lea.sflag [#allocation6], 1
    %610 = vsyncpa %s609, 1
    %611 = vsyncpa [#allocation9], 1
    %612 = vsyncpa [#allocation4], 1
    %s613 = scalar_lea.sflag [#allocation4], 1
    %614 = vsyncpa %s613, 1

// kernel: tpu_custom_call.1
$region0: #{tpu_custom_call.1}
  #allocation0 [shape = 'u32[]', space=smem, size = 0x4, offset = 0x4, fixed_abs, tag = 'smem constant byte address 0x4 - core index']
  #allocation1 [shape = 'u32[144,128]{1,0:T(1,128)}', space=vmem, size = 0x12000, scoped, tag = 'internal scratch']
  %s0 = inlined_call_operand.hbm [shape: f32[16,32], index: 0, kind: input, shape index: {}]
  %s1 = inlined_call_operand.hbm [shape: f32[16,32], index: 1, kind: input, shape index: {}]
  %s2 = inlined_call_operand.hbm [shape: f32[16,32], index: 2, kind: input, shape index: {}]
  %s3 = inlined_call_operand.hbm [shape: f32[3,32,32], index: 3, kind: input, shape index: {}]
  %s4 = inlined_call_operand.vmem [shape: f32[1,32], index: 4, kind: input, shape index: {}]
  %s5 = inlined_call_operand.hbm [shape: f32[16,32], index: 5, kind: output, shape index: {}]
  %s6 = sld [smem:[#allocation0]]
  $region69: #{tpu_custom_call.1} parent=0
    _
  %s8 = ssub.s32 1, %s6
  %s9 = scalar_select 0, %s8, %s6
  $region1: #{tpu_custom_call.1} parent=0
    #allocation2 [shape = 'u8[8192]{0}', space=vmem, size = 0x2000, scoped, tag = 'input window, operand 0']
    #allocation3 [shape = 's32[2]{0}', space=sflag, size = 0x8, scoped, tag = 'scoped memory for tpu_custom_call.1']
    #allocation4 [shape = 's32[2]{0}', space=sflag, size = 0x8, scoped, tag = 'scoped memory for tpu_custom_call.1']
    #allocation5 [shape = 'u8[8192]{0}', space=vmem, size = 0x2000, scoped, tag = 'input window, operand 1']
    #allocation6 [shape = 's32[2]{0}', space=sflag, size = 0x8, scoped, tag = 'scoped memory for tpu_custom_call.1']
    #allocation7 [shape = 'u8[8192]{0}', space=vmem, size = 0x2000, scoped, tag = 'input window, operand 2']
    #allocation8 [shape = 'u8[49152]{0}', space=vmem, size = 0xc000, scoped, tag = 'input window, operand 3, single buffered']
    #allocation9 [shape = 's32[1]{0}', space=sflag, size = 0x4, scoped, tag = 'scoped memory for tpu_custom_call.1']
    #allocation10 [shape = 'u8[8192]{0}', space=vmem, size = 0x2000, scoped, tag = 'output window, operand 0']
    %10 = vsyncpa [#allocation3], 0
    %s11 = scalar_lea.sflag [#allocation3], 1
    %12 = vsyncpa %s11, 0
    %13 = vsyncpa [#allocation6], 0
    %s14 = scalar_lea.sflag [#allocation6], 1
    %15 = vsyncpa %s14, 0
    %16 = vsyncpa [#allocation9], 0
    %17 = vsyncpa [#allocation4], 0
    %s18 = scalar_lea.sflag [#allocation4], 1
    %19 = vsyncpa %s18, 0
    loop: start=0, step=1, limit=4
    $region2: #{tpu_custom_call.1} parent=1 // loop_pre_header
      _
    $region3: #{tpu_custom_call.1} parent=1 // loop_header
      %s21 = sphi 0, %s25
      %p22 = scmp.ge.s32.totalorder %s21, 4
      %s31 = sphi 0, %s33
      %s34 = sphi 0, %s31
      %s35 = sphi 0, %s34
      %s51 = sphi 0, %s35
      %s57 = sphi 0, %s59
      %s60 = sphi 0, %s57
      %s61 = sphi 0, %s60
      %s77 = sphi 0, %s61
      %s83 = sphi 0, %s85
      %s86 = sphi 0, %s83
      %s87 = sphi 0, %s86
      %s103 = sphi 0, %s87
      %s107 = sphi 0, %s107
      %s109 = sphi 0, %s107
      %s110 = sphi 0, %s109
      %s124 = sphi 0, %s110
      %s128 = sphi 0, %s128
      %s130 = sphi 0, %s128
      %s131 = sphi 0, %s130
      %s145 = sphi 0, %s131
      %s151 = sphi 0, %s153
      %s154 = sphi 0, %s151
      %s155 = sphi 0, %s154
      %s171 = sphi 0, %s155
    $region4: #{tpu_custom_call.1} parent=1 // loop_header_branch
      %24 = sbr.rel (%p22) target = $region8
    $region5: #{tpu_custom_call.1} parent=1 // loop_body
      %s26 = ssub.s32 %s21, 1
      %s27 = ssub.s32 %s21, 2
      %s28 = sadd.s32 %s21, 1
      %s29 = ssub.s32 %s21, %s28
      %p30 = scmp.eq.s32.totalorder %s29, 0
      %s32 = sadd.s32 %s31, 1
      %s33 = scalar_select %p30, %s31, %s32
      %p36 = pneg %p30
      %p37 = scmp.eq.s32.totalorder %s21, 1
      %p38 = por %p36, %p37
      %p39 = scmp.ne.s32.totalorder %s31, %s34
      %p40 = scmp.eq.s32.totalorder %s21, 0
      %p41 = por %p39, %p40
      %p42 = scmp.ne.s32.totalorder %s31, %s34
      %p43 = scmp.eq.s32.totalorder %s26, 1
      %p44 = por %p42, %p43
      %p45 = scmp.ne.s32.totalorder %s34, %s35
      %p46 = scmp.eq.s32.totalorder %s26, 0
      %p47 = por %p45, %p46
      %p48 = scmp.ne.s32.totalorder %s34, %s35
      %p49 = scmp.eq.s32.totalorder %s27, 1
      %p50 = por %p48, %p49
      %p52 = scmp.ne.s32.totalorder %s35, %s51
      %p53 = scmp.eq.s32.totalorder %s27, 0
      %p54 = por %p52, %p53
      %s55 = ssub.s32 %s21, %s28
      %p56 = scmp.eq.s32.totalorder %s55, 0
      %s58 = sadd.s32 %s57, 1
      %s59 = scalar_select %p56, %s57, %s58
      %p62 = pneg %p56
      %p63 = scmp.eq.s32.totalorder %s21, 1
      %p64 = por %p62, %p63
      %p65 = scmp.ne.s32.totalorder %s57, %s60
      %p66 = scmp.eq.s32.totalorder %s21, 0
      %p67 = por %p65, %p66
      %p68 = scmp.ne.s32.totalorder %s57, %s60
      %p69 = scmp.eq.s32.totalorder %s26, 1
      %p70 = por %p68, %p69
      %p71 = scmp.ne.s32.totalorder %s60, %s61
      %p72 = scmp.eq.s32.totalorder %s26, 0
      %p73 = por %p71, %p72
      %p74 = scmp.ne.s32.totalorder %s60, %s61
      %p75 = scmp.eq.s32.totalorder %s27, 1
      %p76 = por %p74, %p75
      %p78 = scmp.ne.s32.totalorder %s61, %s77
      %p79 = scmp.eq.s32.totalorder %s27, 0
      %p80 = por %p78, %p79
      %s81 = ssub.s32 %s21, %s28
      %p82 = scmp.eq.s32.totalorder %s81, 0
      %s84 = sadd.s32 %s83, 1
      %s85 = scalar_select %p82, %s83, %s84
      %p88 = pneg %p82
      %p89 = scmp.eq.s32.totalorder %s21, 1
      %p90 = por %p88, %p89
      %p91 = scmp.ne.s32.totalorder %s83, %s86
      %p92 = scmp.eq.s32.totalorder %s21, 0
      %p93 = por %p91, %p92
      %p94 = scmp.ne.s32.totalorder %s83, %s86
      %p95 = scmp.eq.s32.totalorder %s26, 1
      %p96 = por %p94, %p95
      %p97 = scmp.ne.s32.totalorder %s86, %s87
      %p98 = scmp.eq.s32.totalorder %s26, 0
      %p99 = por %p97, %p98
      %p100 = scmp.ne.s32.totalorder %s86, %s87
      %p101 = scmp.eq.s32.totalorder %s27, 1
      %p102 = por %p100, %p101
      %p104 = scmp.ne.s32.totalorder %s87, %s103
      %p105 = scmp.eq.s32.totalorder %s27, 0
      %p106 = por %p104, %p105
      %s108 = sadd.s32 %s107, 1
      %p111 = scmp.eq.s32.totalorder %s21, 1
      %p112 = scmp.ne.s32.totalorder %s107, %s109
      %p113 = scmp.eq.s32.totalorder %s21, 0
      %p114 = por %p112, %p113
      %p115 = scmp.ne.s32.totalorder %s107, %s109
      %p116 = scmp.eq.s32.totalorder %s26, 1
      %p117 = por %p115, %p116
      %p118 = scmp.ne.s32.totalorder %s109, %s110
      %p119 = scmp.eq.s32.totalorder %s26, 0
      %p120 = por %p118, %p119
      %p121 = scmp.ne.s32.totalorder %s109, %s110
      %p122 = scmp.eq.s32.totalorder %s27, 1
      %p123 = por %p121, %p122
      %p125 = scmp.ne.s32.totalorder %s110, %s124
      %p126 = scmp.eq.s32.totalorder %s27, 0
      %p127 = por %p125, %p126
      %s129 = sadd.s32 %s128, 1
      %p132 = scmp.eq.s32.totalorder %s21, 1
      %p133 = scmp.ne.s32.totalorder %s128, %s130
      %p134 = scmp.eq.s32.totalorder %s21, 0
      %p135 = por %p133, %p134
      %p136 = scmp.ne.s32.totalorder %s128, %s130
      %p137 = scmp.eq.s32.totalorder %s26, 1
      %p138 = por %p136, %p137
      %p139 = scmp.ne.s32.totalorder %s130, %s131
      %p140 = scmp.eq.s32.totalorder %s26, 0
      %p141 = por %p139, %p140
      %p142 = scmp.ne.s32.totalorder %s130, %s131
      %p143 = scmp.eq.s32.totalorder %s27, 1
      %p144 = por %p142, %p143
      %p146 = scmp.ne.s32.totalorder %s131, %s145
      %p147 = scmp.eq.s32.totalorder %s27, 0
      %p148 = por %p146, %p147
      %s149 = ssub.s32 %s21, %s28
      %p150 = scmp.eq.s32.totalorder %s149, 0
      %s152 = sadd.s32 %s151, 1
      %s153 = scalar_select %p150, %s151, %s152
      %p156 = pneg %p150
      %p157 = scmp.eq.s32.totalorder %s21, 1
      %p158 = por %p156, %p157
      %p159 = scmp.ne.s32.totalorder %s151, %s154
      %p160 = scmp.eq.s32.totalorder %s21, 0
      %p161 = por %p159, %p160
      %p162 = scmp.ne.s32.totalorder %s151, %s154
      %p163 = scmp.eq.s32.totalorder %s26, 1
      %p164 = por %p162, %p163
      %p165 = scmp.ne.s32.totalorder %s154, %s155
      %p166 = scmp.eq.s32.totalorder %s26, 0
      %p167 = por %p165, %p166
      %p168 = scmp.ne.s32.totalorder %s154, %s155
      %p169 = scmp.eq.s32.totalorder %s27, 1
      %p170 = por %p168, %p169
      %p172 = scmp.ne.s32.totalorder %s155, %s171
      %p173 = scmp.eq.s32.totalorder %s27, 0
      %p174 = por %p172, %p173
      %p175 = scmp.le.s32.totalorder 1, %s21
      %p176 = scmp.lt.s32.totalorder %s21, 3
      %p177 = pnand %p175, %p176
      %p178 = pneg %p177
      // Predicated region
      $region9: #{tpu_custom_call.1} parent=5 // pred_check
        _
      $region10: #{tpu_custom_call.1} parent=5 // pred_check_branch
        %180 = sbr.rel (%p177) target = $region12
      $region11: #{tpu_custom_call.1} parent=5 // pred_region
        %s181 = ssub.s32 %s21, 1
        // Predicated region
        $region13: #{tpu_custom_call.1} parent=11 // pred_check
          %p182 = pneg %p120
        $region14: #{tpu_custom_call.1} parent=11 // pred_check_branch
          %184 = sbr.rel (%p182) target = $region16
        $region15: #{tpu_custom_call.1} parent=11 // pred_region
          %s186 = ssub.s32 1536, 1536
          %187 = vsyncadd [#allocation9], %s186
          %s188 = sshll.u32 [#allocation8], 4
          %s189 = int_to_ptr.vmem [resolvable:$true] %s188
          %194 = dma.hbm_to_vmem [thread:$0]  %s3, 1536, %s189, [#allocation9], 128, 128, 8
        $region16: #{tpu_custom_call.1} parent=11 // pred_fallthru
          _
        // Predicated region
        $region17: #{tpu_custom_call.1} parent=11 // pred_check
          %p195 = pneg %p141
        $region18: #{tpu_custom_call.1} parent=11 // pred_check_branch
          %197 = sbr.rel (%p195) target = $region20
        $region19: #{tpu_custom_call.1} parent=11 // pred_region
          _
        $region20: #{tpu_custom_call.1} parent=11 // pred_fallthru
          _
      $region12: #{tpu_custom_call.1} parent=5 // pred_fallthru
        _
      %p198 = scmp.lt.s32.totalorder %s21, 2
      // Predicated region
      $region21: #{tpu_custom_call.1} parent=5 // pred_check
        %p199 = pneg %p198
      $region22: #{tpu_custom_call.1} parent=5 // pred_check_branch
        %201 = sbr.rel (%p199) target = $region24
      $region23: #{tpu_custom_call.1} parent=5 // pred_region
        // Predicated region
        $region25: #{tpu_custom_call.1} parent=23 // pred_check
          %p202 = pneg %p41
        $region26: #{tpu_custom_call.1} parent=23 // pred_check_branch
          %204 = sbr.rel (%p202) target = $region28
        $region27: #{tpu_custom_call.1} parent=23 // pred_region
          %s205 = sand.u32 %s31, 1
          %s206 = scalar_lea.sflag [#allocation3], %s205
          %s207 = sand.u32 %s31, 1
          %s208 = smul.addr %s207, 8
          %s209 = scalar_lea.vmem [#allocation2], %s208
          %s211 = ssub.s32 128, 128
          %212 = vsyncadd %s206, %s211
          %s213 = smul.addr %s21, 128
          %s214 = scalar_lea.hbm %s0, %s213
          %s216 = sshll.u32 %s209, 4
          %s217 = int_to_ptr.vmem [resolvable:$true] %s216
          %219 = dma.hbm_to_vmem [thread:$0]  %s214, 128, %s217, %s206
        $region28: #{tpu_custom_call.1} parent=23 // pred_fallthru
          _
        // Predicated region
        $region29: #{tpu_custom_call.1} parent=23 // pred_check
          %p220 = pneg %p67
        $region30: #{tpu_custom_call.1} parent=23 // pred_check_branch
          %222 = sbr.rel (%p220) target = $region32
        $region31: #{tpu_custom_call.1} parent=23 // pred_region
          %s223 = sand.u32 %s21, 1
          %s224 = scalar_lea.sflag [#allocation6], %s223
          %s225 = sand.u32 %s57, 1
          %s226 = smul.addr %s225, 8
          %s227 = scalar_lea.vmem [#allocation5], %s226
          %s229 = ssub.s32 128, 128
          %230 = vsyncadd %s224, %s229
          %s231 = smul.addr %s21, 128
          %s232 = scalar_lea.hbm %s1, %s231
          %s234 = sshll.u32 %s227, 4
          %s235 = int_to_ptr.vmem [resolvable:$true] %s234
          %237 = dma.hbm_to_vmem [thread:$0]  %s232, 128, %s235, %s224
        $region32: #{tpu_custom_call.1} parent=23 // pred_fallthru
          _
        // Predicated region
        $region33: #{tpu_custom_call.1} parent=23 // pred_check
          %p238 = pneg %p93
        $region34: #{tpu_custom_call.1} parent=23 // pred_check_branch
          %240 = sbr.rel (%p238) target = $region36
        $region35: #{tpu_custom_call.1} parent=23 // pred_region
          %s241 = sand.u32 %s21, 1
          %s242 = scalar_lea.sflag [#allocation6], %s241
          %s243 = sand.u32 %s83, 1
          %s244 = smul.addr %s243, 8
          %s245 = scalar_lea.vmem [#allocation7], %s244
          %s247 = ssub.s32 128, 128
          %248 = vsyncadd %s242, %s247
          %s249 = smul.addr %s21, 128
          %s250 = scalar_lea.hbm %s2, %s249
          %s252 = sshll.u32 %s245, 4
          %s253 = int_to_ptr.vmem [resolvable:$true] %s252
          %255 = dma.hbm_to_vmem [thread:$0]  %s250, 128, %s253, %s242
        $region36: #{tpu_custom_call.1} parent=23 // pred_fallthru
          _
      $region24: #{tpu_custom_call.1} parent=5 // pred_fallthru
        _
      %p256 = scmp.le.s32.totalorder 1, %s21
      %p257 = scmp.lt.s32.totalorder %s21, 3
      %p258 = pnand %p256, %p257
      %p259 = pneg %p258
      // Predicated region
      $region37: #{tpu_custom_call.1} parent=5 // pred_check
        _
      $region38: #{tpu_custom_call.1} parent=5 // pred_check_branch
        %261 = sbr.rel (%p258) target = $region40
      $region39: #{tpu_custom_call.1} parent=5 // pred_region
        %s262 = ssub.s32 %s21, 1
        %s263 = sand.u32 %s34, 1
        %s264 = scalar_lea.sflag [#allocation3], %s263
        %s265 = sand.u32 %s34, 1
        %s266 = smul.addr %s265, 8
        %s267 = scalar_lea.vmem [#allocation2], %s266
        // Predicated region
        $region41: #{tpu_custom_call.1} parent=39 // pred_check
          %p268 = pneg %p47
        $region42: #{tpu_custom_call.1} parent=39 // pred_check_branch
          %270 = sbr.rel (%p268) target = $region44
        $region43: #{tpu_custom_call.1} parent=39 // pred_region
          %271 = dma.done %s264, 128
        $region44: #{tpu_custom_call.1} parent=39 // pred_fallthru
          _
        %s272 = sand.u32 %s26, 1
        %s273 = scalar_lea.sflag [#allocation6], %s272
        %s274 = sand.u32 %s60, 1
        %s275 = smul.addr %s274, 8
        %s276 = scalar_lea.vmem [#allocation5], %s275
        // Predicated region
        $region45: #{tpu_custom_call.1} parent=39 // pred_check
          %p277 = pneg %p73
        $region46: #{tpu_custom_call.1} parent=39 // pred_check_branch
          %279 = sbr.rel (%p277) target = $region48
        $region47: #{tpu_custom_call.1} parent=39 // pred_region
          %280 = dma.done %s273, 128
        $region48: #{tpu_custom_call.1} parent=39 // pred_fallthru
          _
        %s281 = sand.u32 %s26, 1
        %s282 = scalar_lea.sflag [#allocation6], %s281
        %s283 = sand.u32 %s86, 1
        %s284 = smul.addr %s283, 8
        %s285 = scalar_lea.vmem [#allocation7], %s284
        // Predicated region
        $region49: #{tpu_custom_call.1} parent=39 // pred_check
          %p286 = pneg %p99
        $region50: #{tpu_custom_call.1} parent=39 // pred_check_branch
          %288 = sbr.rel (%p286) target = $region52
        $region51: #{tpu_custom_call.1} parent=39 // pred_region
          %289 = dma.done %s282, 128
        $region52: #{tpu_custom_call.1} parent=39 // pred_fallthru
          _
        // Predicated region
        $region53: #{tpu_custom_call.1} parent=39 // pred_check
          %p290 = pneg %p120
        $region54: #{tpu_custom_call.1} parent=39 // pred_check_branch
          %292 = sbr.rel (%p290) target = $region56
        $region55: #{tpu_custom_call.1} parent=39 // pred_region
          %293 = dma.done [#allocation9], 1536
        $region56: #{tpu_custom_call.1} parent=39 // pred_fallthru
          _
        %s294 = sand.u32 %s34, 1
        %s295 = scalar_lea.sflag [#allocation3], %s294
        %s296 = sand.u32 %s34, 1
        %s297 = smul.addr %s296, 8
        %s298 = scalar_lea.vmem [#allocation2], %s297
        %p299 = pneg %p47
        %p300 = pneg %p44
        %s301 = sand.u32 %s26, 1
        %s302 = scalar_lea.sflag [#allocation6], %s301
        %s303 = sand.u32 %s60, 1
        %s304 = smul.addr %s303, 8
        %s305 = scalar_lea.vmem [#allocation5], %s304
        %p306 = pneg %p73
        %p307 = pneg %p70
        %s308 = sand.u32 %s26, 1
        %s309 = scalar_lea.sflag [#allocation6], %s308
        %s310 = sand.u32 %s86, 1
        %s311 = smul.addr %s310, 8
        %s312 = scalar_lea.vmem [#allocation7], %s311
        %p313 = pneg %p99
        %p314 = pneg %p96
        %p315 = pneg %p120
        %p316 = pneg %p117
        %p317 = pneg %p141
        %p318 = pneg %p138
        %p319 = pneg %p167
        %p320 = pneg %p164
        %s321 = sand.u32 %s154, 1
        %s322 = scalar_lea.sflag [#allocation4], %s321
        %s323 = sand.u32 %s154, 1
        %s324 = smul.addr %s323, 8
        %s325 = scalar_lea.vmem [#allocation10], %s324
        %v326 = vld [vmem:[%s267] sm:$0xff]
        %v327 = vld [vmem:[#allocation8] sm:$0xff]
        %v328 = vld [vmem:[#allocation8 + $0x8] sm:$0xff]
        %v329 = vld [vmem:[#allocation8 + $0x10] sm:$0xff]
        %v330 = vld [vmem:[#allocation8 + $0x18] sm:$0xff]
        %v331 = vld [vmem:[%s276] sm:$0xff]
        %s332 = scalar_lea.vmem [#allocation8], 32
        %v333 = vld [vmem:[%s332] sm:$0xff]
        %v334 = vld [vmem:[%s332 + $0x8] sm:$0xff]
        %v335 = vld [vmem:[%s332 + $0x10] sm:$0xff]
        %v336 = vld [vmem:[%s332 + $0x18] sm:$0xff]
        %vm337 = vcmask 261120
        %v339 = vsel %vm337, %v331, 0
        %341 = vmatprep.subr.mxu0 0.0
        %342 = vmatpush1.msra.mxu0 %v333
        %343 = vmatprep.subr.mxu0 0.0
        %344 = vmatpush1.msra.mxu0 %v334
        %345 = vmatprep.subr.mxu0 0.0
        %346 = vmatpush1.msra.mxu0 %v335
        %347 = vmatprep.subr.mxu0 0.0
        %348 = vmatpush1.msra.mxu0 %v336
        %349 = vmatprep.subr.mxu0 0.0
        %350 = vmatpush1.msra.mxu0 0.0
        %351 = vmatprep.subr.mxu0 0.0
        %352 = vmatpush1.msra.mxu0 0.0
        %353 = vmatprep.subr.mxu0 0.0
        %354 = vmatpush1.msra.mxu0 0.0
        %355 = vmatprep.subr.mxu0 0.0
        %356 = vmatpush1.msra.mxu0 0.0
        %357 = vmatprep.subr.mxu0 0.0
        %358 = vmatpush1.msra.mxu0 0.0
        %359 = vmatprep.subr.mxu0 0.0
        %360 = vmatpush1.msra.mxu0 0.0
        %361 = vmatprep.subr.mxu0 0.0
        %362 = vmatpush1.msra.mxu0 0.0
        %363 = vmatprep.subr.mxu0 0.0
        %364 = vmatpush1.msra.mxu0 0.0
        %365 = vmatprep.subr.mxu0 0.0
        %366 = vmatpush1.msra.mxu0 0.0
        %367 = vmatprep.subr.mxu0 0.0
        %368 = vmatpush1.msra.mxu0 0.0
        %369 = vmatprep.subr.mxu0 0.0
        %370 = vmatpush1.msra.mxu0 0.0
        %371 = vmatprep.subr.mxu0 0.0
        %372 = vmatpush1.msra.mxu0 0.0
        %373 = vmatprep.subr.mxu0 0.0
        %374 = vmatpush1.msra.mxu0 0.0
        %375 = vmatprep.subr.mxu0 0.0
        %376 = vmatpush1.msra.mxu0 0.0
        %377 = vmatprep.subr.mxu0 0.0
        %378 = vmatpush1.msra.mxu0 0.0
        %379 = vmatprep.subr.mxu0 0.0
        %380 = vmatpush1.msra.mxu0 0.0
        %381 = vmatprep.subr.mxu0 0.0
        %382 = vmatpush1.msra.mxu0 0.0
        %383 = vmatprep.subr.mxu0 0.0
        %384 = vmatpush1.msra.mxu0 0.0
        %385 = vmatprep.subr.mxu0 0.0
        %386 = vmatpush1.msra.mxu0 0.0
        %387 = vmatprep.subr.mxu0 0.0
        %388 = vmatpush1.msra.mxu0 0.0
        %389 = vmatprep.subr.mxu0 0.0
        %390 = vmatpush1.msra.mxu0 0.0
        %391 = vmatprep.subr.mxu0 0.0
        %392 = vmatpush1.msra.mxu0 0.0
        %393 = vmatprep.subr.mxu0 0.0
        %394 = vmatpush1.msra.mxu0 0.0
        %395 = vmatprep.subr.mxu0 0.0
        %396 = vmatpush1.msra.mxu0 0.0
        %397 = vmatprep.subr.mxu0 0.0
        %398 = vmatpush1.msra.mxu0 0.0
        %399 = vmatprep.subr.mxu0 0.0
        %400 = vmatpush1.msra.mxu0 0.0
        %401 = vmatprep.subr.mxu0 0.0
        %402 = vmatpush1.msra.mxu0 0.0
        %403 = vmatprep.subr.mxu0 0.0
        %404 = vmatpush1.msra.mxu0 0.0
        %405 = vmatprep.mubr.f32.mxu0 0.0
        %406 = vmatmul.mubr.f32.gmra.mrb[0].mxu0 %v339
        %v407 = vpop.f32.mrb[0].mxu0
        %v408 = vadd.f32 0.0, %v407
        %v409 = vpop.f32.mrb[0].mxu0
        %410 = vdwg.mxu0
        %v412 = vsel %vm337, %v326, 0
        %414 = vmatprep.subr.mxu0 0.0
        %415 = vmatpush1.msra.mxu0 %v327
        %416 = vmatprep.subr.mxu0 0.0
        %417 = vmatpush1.msra.mxu0 %v328
        %418 = vmatprep.subr.mxu0 0.0
        %419 = vmatpush1.msra.mxu0 %v329
        %420 = vmatprep.subr.mxu0 0.0
        %421 = vmatpush1.msra.mxu0 %v330
        %422 = vmatprep.subr.mxu0 0.0
        %423 = vmatpush1.msra.mxu0 0.0
        %424 = vmatprep.subr.mxu0 0.0
        %425 = vmatpush1.msra.mxu0 0.0
        %426 = vmatprep.subr.mxu0 0.0
        %427 = vmatpush1.msra.mxu0 0.0
        %428 = vmatprep.subr.mxu0 0.0
        %429 = vmatpush1.msra.mxu0 0.0
        %430 = vmatprep.subr.mxu0 0.0
        %431 = vmatpush1.msra.mxu0 0.0
        %432 = vmatprep.subr.mxu0 0.0
        %433 = vmatpush1.msra.mxu0 0.0
        %434 = vmatprep.subr.mxu0 0.0
        %435 = vmatpush1.msra.mxu0 0.0
        %436 = vmatprep.subr.mxu0 0.0
        %437 = vmatpush1.msra.mxu0 0.0
        %438 = vmatprep.subr.mxu0 0.0
        %439 = vmatpush1.msra.mxu0 0.0
        %440 = vmatprep.subr.mxu0 0.0
        %441 = vmatpush1.msra.mxu0 0.0
        %442 = vmatprep.subr.mxu0 0.0
        %443 = vmatpush1.msra.mxu0 0.0
        %444 = vmatprep.subr.mxu0 0.0
        %445 = vmatpush1.msra.mxu0 0.0
        %446 = vmatprep.subr.mxu0 0.0
        %447 = vmatpush1.msra.mxu0 0.0
        %448 = vmatprep.subr.mxu0 0.0
        %449 = vmatpush1.msra.mxu0 0.0
        %450 = vmatprep.subr.mxu0 0.0
        %451 = vmatpush1.msra.mxu0 0.0
        %452 = vmatprep.subr.mxu0 0.0
        %453 = vmatpush1.msra.mxu0 0.0
        %454 = vmatprep.subr.mxu0 0.0
        %455 = vmatpush1.msra.mxu0 0.0
        %456 = vmatprep.subr.mxu0 0.0
        %457 = vmatpush1.msra.mxu0 0.0
        %458 = vmatprep.subr.mxu0 0.0
        %459 = vmatpush1.msra.mxu0 0.0
        %460 = vmatprep.subr.mxu0 0.0
        %461 = vmatpush1.msra.mxu0 0.0
        %462 = vmatprep.subr.mxu0 0.0
        %463 = vmatpush1.msra.mxu0 0.0
        %464 = vmatprep.subr.mxu0 0.0
        %465 = vmatpush1.msra.mxu0 0.0
        %466 = vmatprep.subr.mxu0 0.0
        %467 = vmatpush1.msra.mxu0 0.0
        %468 = vmatprep.subr.mxu0 0.0
        %469 = vmatpush1.msra.mxu0 0.0
        %470 = vmatprep.subr.mxu0 0.0
        %471 = vmatpush1.msra.mxu0 0.0
        %472 = vmatprep.subr.mxu0 0.0
        %473 = vmatpush1.msra.mxu0 0.0
        %474 = vmatprep.subr.mxu0 0.0
        %475 = vmatpush1.msra.mxu0 0.0
        %476 = vmatprep.subr.mxu0 0.0
        %477 = vmatpush1.msra.mxu0 0.0
        %478 = vmatprep.mubr.f32.mxu0 0.0
        %479 = vmatmul.mubr.f32.gmra.mrb[0].mxu0 %v412
        %v480 = vpop.f32.mrb[0].mxu0
        %v481 = vadd.f32 %v408, %v480
        %v482 = vpop.f32.mrb[0].mxu0
        %483 = vdwg.mxu0
        %v484 = vld [vmem:[%s285] sm:$0xff]
        %s485 = scalar_lea.vmem [#allocation8], 64
        %v486 = vld [vmem:[%s485] sm:$0xff]
        %v487 = vld [vmem:[%s485 + $0x8] sm:$0xff]
        %v488 = vld [vmem:[%s485 + $0x10] sm:$0xff]
        %v489 = vld [vmem:[%s485 + $0x18] sm:$0xff]
        %v491 = vsel %vm337, %v484, 0
        %493 = vmatprep.subr.mxu0 0.0
        %494 = vmatpush1.msra.mxu0 %v486
        %495 = vmatprep.subr.mxu0 0.0
        %496 = vmatpush1.msra.mxu0 %v487
        %497 = vmatprep.subr.mxu0 0.0
        %498 = vmatpush1.msra.mxu0 %v488
        %499 = vmatprep.subr.mxu0 0.0
        %500 = vmatpush1.msra.mxu0 %v489
        %501 = vmatprep.subr.mxu0 0.0
        %502 = vmatpush1.msra.mxu0 0.0
        %503 = vmatprep.subr.mxu0 0.0
        %504 = vmatpush1.msra.mxu0 0.0
        %505 = vmatprep.subr.mxu0 0.0
        %506 = vmatpush1.msra.mxu0 0.0
        %507 = vmatprep.subr.mxu0 0.0
        %508 = vmatpush1.msra.mxu0 0.0
        %509 = vmatprep.subr.mxu0 0.0
        %510 = vmatpush1.msra.mxu0 0.0
        %511 = vmatprep.subr.mxu0 0.0
        %512 = vmatpush1.msra.mxu0 0.0
        %513 = vmatprep.subr.mxu0 0.0
        %514 = vmatpush1.msra.mxu0 0.0
        %515 = vmatprep.subr.mxu0 0.0
        %516 = vmatpush1.msra.mxu0 0.0
        %517 = vmatprep.subr.mxu0 0.0
        %518 = vmatpush1.msra.mxu0 0.0
        %519 = vmatprep.subr.mxu0 0.0
        %520 = vmatpush1.msra.mxu0 0.0
        %521 = vmatprep.subr.mxu0 0.0
        %522 = vmatpush1.msra.mxu0 0.0
        %523 = vmatprep.subr.mxu0 0.0
        %524 = vmatpush1.msra.mxu0 0.0
        %525 = vmatprep.subr.mxu0 0.0
        %526 = vmatpush1.msra.mxu0 0.0
        %527 = vmatprep.subr.mxu0 0.0
        %528 = vmatpush1.msra.mxu0 0.0
        %529 = vmatprep.subr.mxu0 0.0
        %530 = vmatpush1.msra.mxu0 0.0
        %531 = vmatprep.subr.mxu0 0.0
        %532 = vmatpush1.msra.mxu0 0.0
        %533 = vmatprep.subr.mxu0 0.0
        %534 = vmatpush1.msra.mxu0 0.0
        %535 = vmatprep.subr.mxu0 0.0
        %536 = vmatpush1.msra.mxu0 0.0
        %537 = vmatprep.subr.mxu0 0.0
        %538 = vmatpush1.msra.mxu0 0.0
        %539 = vmatprep.subr.mxu0 0.0
        %540 = vmatpush1.msra.mxu0 0.0
        %541 = vmatprep.subr.mxu0 0.0
        %542 = vmatpush1.msra.mxu0 0.0
        %543 = vmatprep.subr.mxu0 0.0
        %544 = vmatpush1.msra.mxu0 0.0
        %545 = vmatprep.subr.mxu0 0.0
        %546 = vmatpush1.msra.mxu0 0.0
        %547 = vmatprep.subr.mxu0 0.0
        %548 = vmatpush1.msra.mxu0 0.0
        %549 = vmatprep.subr.mxu0 0.0
        %550 = vmatpush1.msra.mxu0 0.0
        %551 = vmatprep.subr.mxu0 0.0
        %552 = vmatpush1.msra.mxu0 0.0
        %553 = vmatprep.subr.mxu0 0.0
        %554 = vmatpush1.msra.mxu0 0.0
        %555 = vmatprep.subr.mxu0 0.0
        %556 = vmatpush1.msra.mxu0 0.0
        %557 = vmatprep.mubr.f32.mxu0 0.0
        %558 = vmatmul.mubr.f32.gmra.mrb[0].mxu0 %v491
        %v559 = vpop.f32.mrb[0].mxu0
        %v560 = vadd.f32 0.0, %v559
        %v561 = vpop.f32.mrb[0].mxu0
        %562 = vdwg.mxu0
        %v563 = vadd.f32 %v481, %v560
        %v564 = vld [vmem:[%s4] sm:$0x1]
        %v566 = vlaneseq
        %v567 = vshrl.u32 %v566, 7
        %v568 = vsub.s32 0, %v567
        %v569 = vrot.slane %v564, %v568
        %v571 = vadd.f32 %v563, %v569
        %572 = vst.msk [vmem:[%s325] sm:$0xff] %vm337, %v571
        %s573 = sand.u32 %s154, 1
        %s574 = scalar_lea.sflag [#allocation4], %s573
        %s575 = sand.u32 %s154, 1
        %s576 = smul.addr %s575, 8
        %s577 = scalar_lea.vmem [#allocation10], %s576
        // Predicated region
        $region57: #{tpu_custom_call.1} parent=39 // pred_check
          %p578 = pneg %p164
        $region58: #{tpu_custom_call.1} parent=39 // pred_check_branch
          %580 = sbr.rel (%p578) target = $region60
        $region59: #{tpu_custom_call.1} parent=39 // pred_region
          %s582 = ssub.s32 128, 128
          %583 = vsyncadd %s574, %s582
          %s584 = smul.addr %s26, 128
          %s585 = scalar_lea.hbm %s5, %s584
          %s587 = sshll.u32 %s577, 4
          %s588 = int_to_ptr.vmem [resolvable:$true] %s587
          %590 = dma.vmem_to_hbm [thread:$0]  %s588, 128, %s585, %s574
        $region60: #{tpu_custom_call.1} parent=39 // pred_fallthru
          _
      $region40: #{tpu_custom_call.1} parent=5 // pred_fallthru
        _
      %p591 = scmp.le.s32.totalorder 2, %s21
      // Predicated region
      $region61: #{tpu_custom_call.1} parent=5 // pred_check
        %p592 = pneg %p591
      $region62: #{tpu_custom_call.1} parent=5 // pred_check_branch
        %594 = sbr.rel (%p592) target = $region64
      $region63: #{tpu_custom_call.1} parent=5 // pred_region
        %s595 = ssub.s32 %s21, 2
        // Predicated region
        $region65: #{tpu_custom_call.1} parent=63 // pred_check
          %p596 = pneg %p170
        $region66: #{tpu_custom_call.1} parent=63 // pred_check_branch
          %598 = sbr.rel (%p596) target = $region68
        $region67: #{tpu_custom_call.1} parent=63 // pred_region
          %s599 = sand.u32 %s155, 1
          %s600 = scalar_lea.sflag [#allocation4], %s599
          %s601 = sand.u32 %s155, 1
          %s602 = smul.addr %s601, 8
          %s603 = scalar_lea.vmem [#allocation10], %s602
          %604 = dma.done %s600, 128
        $region68: #{tpu_custom_call.1} parent=63 // pred_fallthru
          _
      $region64: #{tpu_custom_call.1} parent=5 // pred_fallthru
        _
    $region6: #{tpu_custom_call.1} parent=1 // loop_footer
      %s25 = sadd.s32 1, %s21
    $region7: #{tpu_custom_call.1} parent=1 // loop_footer_branch
      %20 = sbr.rel target = $region3
    $region8: #{tpu_custom_call.1} parent=1 // loop_exit
      _
    %605 = vsyncpa [#allocation3], 1
    %s606 = scalar_lea.sflag [#allocation3], 1
    %607 = vsyncpa %s606, 1
    %608 = vsyncpa [#allocation6], 1
    %s609 = scalar_lea.sflag [#allocation6], 1
    %610 = vsyncpa %s609, 1
    %611 = vsyncpa [#allocation9], 1
    %612 = vsyncpa [#allocation4], 1
    %s613 = scalar_lea.sflag [#allocation4], 1
    %614 = vsyncpa %s613, 1

</llo_original>
